<compile_context>
chip_gen: v7x
topology: tpu7x:2x2x1
jax: 0.10.0
libtpu: 0.0.40
codegen_flags: <defaults>
</compile_context>

<pallas_src>
import math

import jax
import jax.numpy as jnp
from jax.experimental import pallas as pl
from jax.experimental.pallas import tpu as pltpu


# ----------------------------------------------------------------------------
# Kernel 1: StaticDotAttention + Gate + GRU input projection (both directions).
# Grid over blocks of dim0 (the attention's bmm-batch axis).
# ----------------------------------------------------------------------------
def _attn_gate_proj_kernel(x_ref, m_ref, mask_ref, wp_ref, wg_ref,
                           wih_ref, bih_ref, out_ref):
    # x_ref, m_ref : (Bb, S1, D)      mask_ref : (Bb, 1, S1)
    # wp_ref : (D, A)                 wg_ref : (2D, 2D)
    # wih_ref : (ND, 2D, 3H)          bih_ref : (ND, 1, 3H)
    # out_ref : (ND, Bb, S1, 3H)
    Bb, S1, D = x_ref.shape
    A = wp_ref.shape[-1]
    num_dir = out_ref.shape[0]
    H3 = out_ref.shape[-1]

    x = x_ref[...]
    m = m_ref[...]
    mask = mask_ref[...]                                   # (Bb, 1, S1)
    wp = wp_ref[...]

    # input_linear = RNNDropout (identity @ eval) -> Linear(no bias) -> ReLU.
    # Flatten (Bb, S1) so the weight matmuls run as one wide 2-D matmul.
    x2 = x.reshape(Bb * S1, D)
    m2 = m.reshape(Bb * S1, D)
    xp = jnp.maximum(
        jnp.dot(x2, wp, preferred_element_type=jnp.float32), 0.0
    ).reshape(Bb, S1, A)
    mp = jnp.maximum(
        jnp.dot(m2, wp, preferred_element_type=jnp.float32), 0.0
    ).reshape(Bb, S1, A)

    scale = 1.0 / math.sqrt(float(A))
    # Batched bmm, contracting the attention dim of both (no transpose).
    logits = jnp.einsum("bqa,bka->bqk", xp, mp,
                        preferred_element_type=jnp.float32) * scale  # (Bb,S1,S1)

    # masked_softmax, algebraically simplified:
    #   softmax(t*mask)*mask / (sum(...) + eps)  ==  e*mask / (sum(e*mask) + eps)
    mask_b = jnp.broadcast_to(mask, logits.shape)          # (Bb, S1, S1)
    t = logits * mask_b
    t = t - jnp.max(t, axis=-1, keepdims=True)
    e = jnp.exp(t)
    r = e * mask_b
    score = r * pl.reciprocal(jnp.sum(r, axis=-1, keepdims=True) + 1e-13,
                              approx=True)

    context = jnp.einsum("bqk,bkd->bqd", score, m,
                         preferred_element_type=jnp.float32)          # (Bb,S1,D)
    c2 = context.reshape(Bb * S1, D)

    # Gate without materializing the [context, x] concat: split weight rows.
    wg = wg_ref[...]
    g = jax.nn.sigmoid(
        jnp.dot(c2, wg[:D, :], preferred_element_type=jnp.float32)
        + jnp.dot(x2, wg[D:, :], preferred_element_type=jnp.float32))  # (Bb*S1,2D)
    gated_c = c2 * g[:, :D]
    gated_x = x2 * g[:, D:]

    # Fused, time-parallel GRU input projections (gate order [r|z|n]).
    for d in range(num_dir):
        wih_d = wih_ref[d]                                 # (2D, 3H)
        bih_d = bih_ref[d]                                 # (1, 3H)
        proj = (jnp.dot(gated_c, wih_d[:D, :], preferred_element_type=jnp.float32)
                + jnp.dot(gated_x, wih_d[D:, :], preferred_element_type=jnp.float32)
                + bih_d)                                   # (Bb*S1, 3H)
        out_ref[d] = proj.reshape(Bb, S1, H3).astype(out_ref.dtype)


def attn_gate_proj(x, m, mask, wp, wg, wih, bih, block_s0=None):
    S0, S1, D = x.shape
    A = wp.shape[1]
    ND, _, H3 = wih.shape
    Bb = S0 if block_s0 is None else block_s0
    assert S0 % Bb == 0
    mask3 = mask.reshape(S0, 1, S1).astype(jnp.float32)
    return pl.pallas_call(
        _attn_gate_proj_kernel,
        out_shape=jax.ShapeDtypeStruct((ND, S0, S1, H3), jnp.float32),
        grid_spec=pltpu.PrefetchScalarGridSpec(
            num_scalar_prefetch=0,
            grid=(S0 // Bb,),
            in_specs=[
                pl.BlockSpec((Bb, S1, D), lambda i: (i, 0, 0)),
                pl.BlockSpec((Bb, S1, D), lambda i: (i, 0, 0)),
                pl.BlockSpec((Bb, 1, S1), lambda i: (i, 0, 0)),
                pl.BlockSpec((D, A), lambda i: (0, 0)),
                pl.BlockSpec((2 * D, 2 * D), lambda i: (0, 0)),
                pl.BlockSpec((ND, 2 * D, H3), lambda i: (0, 0, 0)),
                pl.BlockSpec((ND, 1, H3), lambda i: (0, 0, 0)),
            ],
            out_specs=pl.BlockSpec((ND, Bb, S1, H3), lambda i: (0, i, 0, 0)),
        ),
        compiler_params=pltpu.CompilerParams(
            dimension_semantics=("parallel",)),
    )(x, m, mask3, wp, wg, wih, bih)


# ----------------------------------------------------------------------------
# Kernel 2: GRU recurrence.  Grid over directions ("parallel" -> the forward
# and backward GRU can run on different TensorCores on v7x).  The time loop is
# an in-kernel fori_loop; the backward direction indexes time as T-1-t so no
# reversed arrays are ever materialized.
# ----------------------------------------------------------------------------
def _gru_kernel(xp_ref, whh_ref, bhh_ref, out_ref):
    # xp_ref : (T, B, 3H)  whh_ref : (H, 3H)  bhh_ref : (1, 3H)  out_ref : (T, B, H)
    T, B, _ = xp_ref.shape
    H = out_ref.shape[-1]
    reverse = pl.program_id(0) != 0          # direction 1 runs backward in time

    whh = whh_ref[...]                       # (H, 3H), gates packed [r|z|n]
    bhh = bhh_ref[...]                       # (1, 3H)

    def step(t, h):
        idx = jnp.where(reverse, T - 1 - t, t)
        xp_t = xp_ref[idx]                   # (B, 3H)  precomputed x@Wih + bih
        hh = jnp.dot(h, whh, preferred_element_type=jnp.float32) + bhh
        r = jax.nn.sigmoid(xp_t[:, 0:H] + hh[:, 0:H])
        z = jax.nn.sigmoid(xp_t[:, H:2 * H] + hh[:, H:2 * H])
        n = jnp.tanh(xp_t[:, 2 * H:3 * H] + r * hh[:, 2 * H:3 * H])
        h_new = (1.0 - z) * n + z * h
        out_ref[idx] = h_new.astype(out_ref.dtype)
        return h_new

    jax.lax.fori_loop(0, T, step, jnp.zeros((B, H), jnp.float32))


def gru_recurrence(xproj, whh, bhh):
    # xproj: (ND, T, B, 3H)  whh: (ND, H, 3H)  bhh: (ND, 1, 3H)
    ND, T, B, H3 = xproj.shape
    H = H3 // 3
    return pl.pallas_call(
        _gru_kernel,
        out_shape=jax.ShapeDtypeStruct((ND, T, B, H), jnp.float32),
        grid_spec=pltpu.PrefetchScalarGridSpec(
            num_scalar_prefetch=0,
            grid=(ND,),
            in_specs=[
                pl.BlockSpec((None, T, B, H3), lambda d: (d, 0, 0, 0)),
                pl.BlockSpec((None, H, H3), lambda d: (d, 0, 0)),
                pl.BlockSpec((None, 1, H3), lambda d: (d, 0, 0)),
            ],
            out_specs=pl.BlockSpec((None, T, B, H), lambda d: (d, 0, 0, 0)),
        ),
        compiler_params=pltpu.CompilerParams(
            dimension_semantics=("parallel",)),
    )(xproj, whh, bhh)


# ----------------------------------------------------------------------------
# PairEncoder forward.
# ----------------------------------------------------------------------------
def pair_encoder_forward(params, inputs, memory, memory_mask, bidirectional=True):
    xproj = attn_gate_proj(inputs, memory, memory_mask,
                           params["wp"], params["wg"],
                           params["wih"], params["bih"])   # (ND, S0, S1, 3H)
    out = gru_recurrence(xproj, params["whh"], params["bhh"])  # (ND, S0, S1, H)
    if out.shape[0] == 1:
        return out[0]
    return jnp.concatenate([out[0], out[1]], axis=-1)          # (S0, S1, 2H)


def init_params(key, input_size, memory_size, attention_size, hidden_size,
                bidirectional=True):
    assert input_size == memory_size, \
        "StaticDotAttention applies the same Linear to input and memory"
    d2 = input_size + memory_size
    nd = 2 if bidirectional else 1
    ks = jax.random.split(key, 6)

    def uni(k, shape, fan_in):
        b = 1.0 / math.sqrt(fan_in)
        return jax.random.uniform(k, shape, jnp.float32, -b, b)

    return {
        # attention projection Linear(input_size -> attention_size), stored (in, out)
        "wp": uni(ks[0], (input_size, attention_size), input_size),
        # gate Linear(2D -> 2D, no bias), stored (in, out); rows [:D]=context, [D:]=x
        "wg": uni(ks[1], (d2, d2), d2),
        # GRU weights, gates packed [r|z|n] along the last axis, stored (in, 3H),
        # leading axis = direction (0=forward, 1=backward)
        "wih": uni(ks[2], (nd, d2, 3 * hidden_size), hidden_size),
        "whh": uni(ks[3], (nd, hidden_size, 3 * hidden_size), hidden_size),
        "bih": uni(ks[4], (nd, 1, 3 * hidden_size), hidden_size),
        "bhh": uni(ks[5], (nd, 1, 3 * hidden_size), hidden_size),
    }


if __name__ == "__main__":
    S0, S1 = 4, 8        # dim0 (attn-batch / GRU-time), dim1 (attn-seq / GRU-batch)
    D = 32               # input_size == memory_size
    ATT = 16             # attention_size
    HID = 32             # GRU hidden size
    BIDIR = True

    key = jax.random.PRNGKey(0)
    k_in, k_mem, k_par = jax.random.split(key, 3)

    x = jax.random.normal(k_in, (S0, S1, D), jnp.float32)
    mem = jax.random.normal(k_mem, (S0, S1, D), jnp.float32)
    lengths = jnp.array([8, 6, 4, 8], jnp.int32)
    memory_mask = (jnp.arange(S1)[None, :] < lengths[:, None]).astype(jnp.float32)

    params = init_params(k_par, D, D, ATT, HID, bidirectional=BIDIR)

    out = pair_encoder_forward(params, x, mem, memory_mask, bidirectional=BIDIR)
    out = jax.block_until_ready(out)

    expected_shape = (S0, S1, HID * (2 if BIDIR else 1))
    assert out.shape == expected_shape, (out.shape, expected_shape)
    assert bool(jnp.all(jnp.isfinite(out)))
    print("KERNEL_OK")
</pallas_src>

<mosaic_0001>
module attributes {stable_mosaic.version = 11 : i64} {
  func.func @_attn_gate_proj_kernel(%arg0: i32, %arg1: memref<4x8x32xf32, #tpu.memory_space<vmem>>, %arg2: memref<4x8x32xf32, #tpu.memory_space<vmem>>, %arg3: memref<4x1x8xf32, #tpu.memory_space<vmem>>, %arg4: memref<32x16xf32, #tpu.memory_space<vmem>>, %arg5: memref<64x64xf32, #tpu.memory_space<vmem>>, %arg6: memref<2x64x96xf32, #tpu.memory_space<vmem>>, %arg7: memref<2x1x96xf32, #tpu.memory_space<vmem>>, %arg8: memref<2x4x8x96xf32, #tpu.memory_space<vmem>>) attributes {dimension_semantics = [#tpu.dimension_semantics<parallel>], iteration_bounds = array<i64: 1>, scalar_prefetch = 0 : i64, scratch_operands = 0 : i64, tpu.core_type = #tpu.core_type<tc>, window_params = [{transform_indices = @transform_0, window_bounds = array<i64: 4, 8, 32>}, {transform_indices = @transform_1, window_bounds = array<i64: 4, 8, 32>}, {transform_indices = @transform_2, window_bounds = array<i64: 4, 1, 8>}, {pipeline_mode = #tpu.pipeline_mode<synchronous>, transform_indices = @transform_3, window_bounds = array<i64: 32, 16>}, {pipeline_mode = #tpu.pipeline_mode<synchronous>, transform_indices = @transform_4, window_bounds = array<i64: 64, 64>}, {pipeline_mode = #tpu.pipeline_mode<synchronous>, transform_indices = @transform_5, window_bounds = array<i64: 2, 64, 96>}, {pipeline_mode = #tpu.pipeline_mode<synchronous>, transform_indices = @transform_6, window_bounds = array<i64: 2, 1, 96>}, {transform_indices = @transform_7, window_bounds = array<i64: 2, 4, 8, 96>}]} {
    %c0 = arith.constant 0 : index
    %c0_0 = arith.constant 0 : index
    %c0_1 = arith.constant 0 : index
    %0 = vector.load %arg1[%c0, %c0_0, %c0_1] : memref<4x8x32xf32, #tpu.memory_space<vmem>>, vector<4x8x32xf32>
    %c0_2 = arith.constant 0 : index
    %c0_3 = arith.constant 0 : index
    %c0_4 = arith.constant 0 : index
    %1 = vector.load %arg2[%c0_2, %c0_3, %c0_4] : memref<4x8x32xf32, #tpu.memory_space<vmem>>, vector<4x8x32xf32>
    %c0_5 = arith.constant 0 : index
    %c0_6 = arith.constant 0 : index
    %c0_7 = arith.constant 0 : index
    %2 = vector.load %arg3[%c0_5, %c0_6, %c0_7] : memref<4x1x8xf32, #tpu.memory_space<vmem>>, vector<4x1x8xf32>
    %c0_8 = arith.constant 0 : index
    %c0_9 = arith.constant 0 : index
    %3 = vector.load %arg4[%c0_8, %c0_9] : memref<32x16xf32, #tpu.memory_space<vmem>>, vector<32x16xf32>
    %4 = vector.shape_cast %0 : vector<4x8x32xf32> to vector<32x32xf32>
    %5 = vector.shape_cast %1 : vector<4x8x32xf32> to vector<32x32xf32>
    %cst = arith.constant dense<0.000000e+00> : vector<32x16xf32>
    %6 = tpu.matmul %4, %3, %cst {dimension_numbers = #tpu.dot_dimension_numbers<[1], [0], [0], [1], [0, 0, 1, 1], [], []>} : vector<32x32xf32>, vector<32x16xf32>, vector<32x16xf32> -> vector<32x16xf32>
    %cst_10 = arith.constant 0.000000e+00 : f32
    %7 = vector.broadcast %cst_10 : f32 to vector<32x16xf32>
    %8 = arith.maximumf %6, %7 : vector<32x16xf32>
    %9 = vector.shape_cast %8 : vector<32x16xf32> to vector<4x8x16xf32>
    %cst_11 = arith.constant dense<0.000000e+00> : vector<32x16xf32>
    %10 = tpu.matmul %5, %3, %cst_11 {dimension_numbers = #tpu.dot_dimension_numbers<[1], [0], [0], [1], [0, 0, 1, 1], [], []>} : vector<32x32xf32>, vector<32x16xf32>, vector<32x16xf32> -> vector<32x16xf32>
    %cst_12 = arith.constant 0.000000e+00 : f32
    %11 = vector.broadcast %cst_12 : f32 to vector<32x16xf32>
    %12 = arith.maximumf %10, %11 : vector<32x16xf32>
    %13 = vector.shape_cast %12 : vector<32x16xf32> to vector<4x8x16xf32>
    "tpu.trace_start"() <{level = 10 : i32, message = "bqa,bka->bqk"}> : () -> ()
    %cst_13 = arith.constant dense<0.000000e+00> : vector<4x8x8xf32>
    %14 = tpu.matmul %9, %13, %cst_13 {dimension_numbers = #tpu.dot_dimension_numbers<[2], [2], [1], [1], [0, 0, 0, 1, 1, 1], [0], [0]>} : vector<4x8x16xf32>, vector<4x8x16xf32>, vector<4x8x8xf32> -> vector<4x8x8xf32>
    "tpu.trace_stop"() : () -> ()
    %cst_14 = arith.constant 2.500000e-01 : f32
    %15 = vector.broadcast %cst_14 : f32 to vector<4x8x8xf32>
    %16 = arith.mulf %14, %15 : vector<4x8x8xf32>
    %17 = vector.shape_cast %2 : vector<4x1x8xf32> to vector<4x1x8xf32>
    %18 = vector.broadcast %17 : vector<4x1x8xf32> to vector<4x8x8xf32>
    %19 = arith.mulf %16, %18 : vector<4x8x8xf32>
    %cst_15 = arith.constant dense<0xFF800000> : vector<4x8xf32>
    %20 = vector.multi_reduction <maximumf>, %19, %cst_15 [2] : vector<4x8x8xf32> to vector<4x8xf32>
    %21 = vector.shape_cast %20 : vector<4x8xf32> to vector<4x8x1xf32>
    %22 = vector.broadcast %21 : vector<4x8x1xf32> to vector<4x8x8xf32>
    %23 = arith.subf %19, %22 : vector<4x8x8xf32>
    %24 = math.exp %23 : vector<4x8x8xf32>
    %25 = arith.mulf %24, %18 : vector<4x8x8xf32>
    %cst_16 = arith.constant dense<0.000000e+00> : vector<4x8xf32>
    %26 = vector.multi_reduction <add>, %25, %cst_16 [2] : vector<4x8x8xf32> to vector<4x8xf32>
    %27 = vector.shape_cast %26 : vector<4x8xf32> to vector<4x8x1xf32>
    %cst_17 = arith.constant 9.99999982E-14 : f32
    %28 = vector.broadcast %cst_17 : f32 to vector<4x8x1xf32>
    %29 = arith.addf %27, %28 : vector<4x8x1xf32>
    %30 = tpu.reciprocal %29 {approx = true} : vector<4x8x1xf32> -> vector<4x8x1xf32>
    %31 = vector.broadcast %30 : vector<4x8x1xf32> to vector<4x8x8xf32>
    %32 = arith.mulf %25, %31 : vector<4x8x8xf32>
    "tpu.trace_start"() <{level = 10 : i32, message = "bqk,bkd->bqd"}> : () -> ()
    %cst_18 = arith.constant dense<0.000000e+00> : vector<4x8x32xf32>
    %33 = tpu.matmul %32, %1, %cst_18 {dimension_numbers = #tpu.dot_dimension_numbers<[2], [1], [1], [2], [0, 0, 0, 1, 1, 2], [0], [0]>} : vector<4x8x8xf32>, vector<4x8x32xf32>, vector<4x8x32xf32> -> vector<4x8x32xf32>
    "tpu.trace_stop"() : () -> ()
    %34 = vector.shape_cast %33 : vector<4x8x32xf32> to vector<32x32xf32>
    %c0_19 = arith.constant 0 : index
    %c0_20 = arith.constant 0 : index
    %35 = vector.load %arg5[%c0_19, %c0_20] : memref<64x64xf32, #tpu.memory_space<vmem>>, vector<64x64xf32>
    %36 = vector.extract_strided_slice %35 {offsets = [0, 0], sizes = [32, 64], strides = [1, 1]} : vector<64x64xf32> to vector<32x64xf32>
    %cst_21 = arith.constant dense<0.000000e+00> : vector<32x64xf32>
    %37 = tpu.matmul %34, %36, %cst_21 {dimension_numbers = #tpu.dot_dimension_numbers<[1], [0], [0], [1], [0, 0, 1, 1], [], []>} : vector<32x32xf32>, vector<32x64xf32>, vector<32x64xf32> -> vector<32x64xf32>
    %38 = vector.extract_strided_slice %35 {offsets = [32, 0], sizes = [32, 64], strides = [1, 1]} : vector<64x64xf32> to vector<32x64xf32>
    %cst_22 = arith.constant dense<0.000000e+00> : vector<32x64xf32>
    %39 = tpu.matmul %4, %38, %cst_22 {dimension_numbers = #tpu.dot_dimension_numbers<[1], [0], [0], [1], [0, 0, 1, 1], [], []>} : vector<32x32xf32>, vector<32x64xf32>, vector<32x64xf32> -> vector<32x64xf32>
    %40 = arith.addf %37, %39 : vector<32x64xf32>
    %41 = arith.negf %40 : vector<32x64xf32>
    %42 = math.exp %41 : vector<32x64xf32>
    %cst_23 = arith.constant 1.000000e+00 : f32
    %43 = vector.broadcast %cst_23 : f32 to vector<32x64xf32>
    %44 = arith.addf %43, %42 : vector<32x64xf32>
    %45 = arith.divf %43, %44 : vector<32x64xf32>
    %46 = vector.extract_strided_slice %45 {offsets = [0, 0], sizes = [32, 32], strides = [1, 1]} : vector<32x64xf32> to vector<32x32xf32>
    %47 = arith.mulf %34, %46 : vector<32x32xf32>
    %48 = vector.extract_strided_slice %45 {offsets = [0, 32], sizes = [32, 32], strides = [1, 1]} : vector<32x64xf32> to vector<32x32xf32>
    %49 = arith.mulf %4, %48 : vector<32x32xf32>
    %c0_24 = arith.constant 0 : index
    %c0_25 = arith.constant 0 : index
    %c0_26 = arith.constant 0 : index
    %50 = vector.load %arg6[%c0_24, %c0_25, %c0_26] : memref<2x64x96xf32, #tpu.memory_space<vmem>>, vector<1x64x96xf32>
    %51 = vector.shape_cast %50 : vector<1x64x96xf32> to vector<64x96xf32>
    %c0_27 = arith.constant 0 : index
    %c0_28 = arith.constant 0 : index
    %c0_29 = arith.constant 0 : index
    %52 = vector.load %arg7[%c0_27, %c0_28, %c0_29] : memref<2x1x96xf32, #tpu.memory_space<vmem>>, vector<1x1x96xf32>
    %53 = vector.shape_cast %52 : vector<1x1x96xf32> to vector<1x96xf32>
    %54 = vector.extract_strided_slice %51 {offsets = [0, 0], sizes = [32, 96], strides = [1, 1]} : vector<64x96xf32> to vector<32x96xf32>
    %cst_30 = arith.constant dense<0.000000e+00> : vector<32x96xf32>
    %55 = tpu.matmul %47, %54, %cst_30 {dimension_numbers = #tpu.dot_dimension_numbers<[1], [0], [0], [1], [0, 0, 1, 1], [], []>} : vector<32x32xf32>, vector<32x96xf32>, vector<32x96xf32> -> vector<32x96xf32>
    %56 = vector.extract_strided_slice %51 {offsets = [32, 0], sizes = [32, 96], strides = [1, 1]} : vector<64x96xf32> to vector<32x96xf32>
    %cst_31 = arith.constant dense<0.000000e+00> : vector<32x96xf32>
    %57 = tpu.matmul %49, %56, %cst_31 {dimension_numbers = #tpu.dot_dimension_numbers<[1], [0], [0], [1], [0, 0, 1, 1], [], []>} : vector<32x32xf32>, vector<32x96xf32>, vector<32x96xf32> -> vector<32x96xf32>
    %58 = arith.addf %55, %57 : vector<32x96xf32>
    %59 = vector.broadcast %53 : vector<1x96xf32> to vector<32x96xf32>
    %60 = arith.addf %58, %59 : vector<32x96xf32>
    %61 = vector.shape_cast %60 : vector<32x96xf32> to vector<4x8x96xf32>
    %c0_32 = arith.constant 0 : index
    %c0_33 = arith.constant 0 : index
    %c0_34 = arith.constant 0 : index
    %c0_35 = arith.constant 0 : index
    %62 = vector.load %arg8[%c0_32, %c0_33, %c0_34, %c0_35] : memref<2x4x8x96xf32, #tpu.memory_space<vmem>>, vector<1x4x8x96xf32>
    %63 = vector.shape_cast %62 : vector<1x4x8x96xf32> to vector<4x8x96xf32>
    %64 = vector.shape_cast %61 : vector<4x8x96xf32> to vector<1x4x8x96xf32>
    tpu.vector_store %arg8[%c0_32, %c0_33, %c0_34, %c0_35], %64 {strides = array<i32>} : memref<2x4x8x96xf32, #tpu.memory_space<vmem>>, vector<1x4x8x96xf32>,
    %c1 = arith.constant 1 : index
    %c0_36 = arith.constant 0 : index
    %c0_37 = arith.constant 0 : index
    %65 = vector.load %arg6[%c1, %c0_36, %c0_37] : memref<2x64x96xf32, #tpu.memory_space<vmem>>, vector<1x64x96xf32>
    %66 = vector.shape_cast %65 : vector<1x64x96xf32> to vector<64x96xf32>
    %c1_38 = arith.constant 1 : index
    %c0_39 = arith.constant 0 : index
    %c0_40 = arith.constant 0 : index
    %67 = vector.load %arg7[%c1_38, %c0_39, %c0_40] : memref<2x1x96xf32, #tpu.memory_space<vmem>>, vector<1x1x96xf32>
    %68 = vector.shape_cast %67 : vector<1x1x96xf32> to vector<1x96xf32>
    %69 = vector.extract_strided_slice %66 {offsets = [0, 0], sizes = [32, 96], strides = [1, 1]} : vector<64x96xf32> to vector<32x96xf32>
    %cst_41 = arith.constant dense<0.000000e+00> : vector<32x96xf32>
    %70 = tpu.matmul %47, %69, %cst_41 {dimension_numbers = #tpu.dot_dimension_numbers<[1], [0], [0], [1], [0, 0, 1, 1], [], []>} : vector<32x32xf32>, vector<32x96xf32>, vector<32x96xf32> -> vector<32x96xf32>
    %71 = vector.extract_strided_slice %66 {offsets = [32, 0], sizes = [32, 96], strides = [1, 1]} : vector<64x96xf32> to vector<32x96xf32>
    %cst_42 = arith.constant dense<0.000000e+00> : vector<32x96xf32>
    %72 = tpu.matmul %49, %71, %cst_42 {dimension_numbers = #tpu.dot_dimension_numbers<[1], [0], [0], [1], [0, 0, 1, 1], [], []>} : vector<32x32xf32>, vector<32x96xf32>, vector<32x96xf32> -> vector<32x96xf32>
    %73 = arith.addf %70, %72 : vector<32x96xf32>
    %74 = vector.broadcast %68 : vector<1x96xf32> to vector<32x96xf32>
    %75 = arith.addf %73, %74 : vector<32x96xf32>
    %76 = vector.shape_cast %75 : vector<32x96xf32> to vector<4x8x96xf32>
    %c1_43 = arith.constant 1 : index
    %c0_44 = arith.constant 0 : index
    %c0_45 = arith.constant 0 : index
    %c0_46 = arith.constant 0 : index
    %77 = vector.load %arg8[%c1_43, %c0_44, %c0_45, %c0_46] : memref<2x4x8x96xf32, #tpu.memory_space<vmem>>, vector<1x4x8x96xf32>
    %78 = vector.shape_cast %77 : vector<1x4x8x96xf32> to vector<4x8x96xf32>
    %79 = vector.shape_cast %76 : vector<4x8x96xf32> to vector<1x4x8x96xf32>
    tpu.vector_store %arg8[%c1_43, %c0_44, %c0_45, %c0_46], %79 {strides = array<i32>} : memref<2x4x8x96xf32, #tpu.memory_space<vmem>>, vector<1x4x8x96xf32>,
    return
  }
  func.func @transform_0(%arg0: i32) -> (i32, i32, i32) {
    %c0_i32 = arith.constant 0 : i32
    %c0_i32_0 = arith.constant 0 : i32
    %c0_i32_1 = arith.constant 0 : i32
    return %arg0, %c0_i32, %c0_i32_0 : i32, i32, i32
  }
  func.func @transform_1(%arg0: i32) -> (i32, i32, i32) {
    %c0_i32 = arith.constant 0 : i32
    %c0_i32_0 = arith.constant 0 : i32
    %c0_i32_1 = arith.constant 0 : i32
    return %arg0, %c0_i32, %c0_i32_0 : i32, i32, i32
  }
  func.func @transform_2(%arg0: i32) -> (i32, i32, i32) {
    %c0_i32 = arith.constant 0 : i32
    %c0_i32_0 = arith.constant 0 : i32
    %c0_i32_1 = arith.constant 0 : i32
    return %arg0, %c0_i32, %c0_i32_0 : i32, i32, i32
  }
  func.func @transform_3(%arg0: i32) -> (i32, i32) {
    %c0_i32 = arith.constant 0 : i32
    %c0_i32_0 = arith.constant 0 : i32
    %c0_i32_1 = arith.constant 0 : i32
    return %c0_i32, %c0_i32_0 : i32, i32
  }
  func.func @transform_4(%arg0: i32) -> (i32, i32) {
    %c0_i32 = arith.constant 0 : i32
    %c0_i32_0 = arith.constant 0 : i32
    %c0_i32_1 = arith.constant 0 : i32
    return %c0_i32, %c0_i32_0 : i32, i32
  }
  func.func @transform_5(%arg0: i32) -> (i32, i32, i32) {
    %c0_i32 = arith.constant 0 : i32
    %c0_i32_0 = arith.constant 0 : i32
    %c0_i32_1 = arith.constant 0 : i32
    %c0_i32_2 = arith.constant 0 : i32
    return %c0_i32, %c0_i32_0, %c0_i32_1 : i32, i32, i32
  }
  func.func @transform_6(%arg0: i32) -> (i32, i32, i32) {
    %c0_i32 = arith.constant 0 : i32
    %c0_i32_0 = arith.constant 0 : i32
    %c0_i32_1 = arith.constant 0 : i32
    %c0_i32_2 = arith.constant 0 : i32
    return %c0_i32, %c0_i32_0, %c0_i32_1 : i32, i32, i32
  }
  func.func @transform_7(%arg0: i32) -> (i32, i32, i32, i32) {
    %c0_i32 = arith.constant 0 : i32
    %c0_i32_0 = arith.constant 0 : i32
    %c0_i32_1 = arith.constant 0 : i32
    %c0_i32_2 = arith.constant 0 : i32
    return %c0_i32, %arg0, %c0_i32_0, %c0_i32_1 : i32, i32, i32, i32
  }
}

</mosaic_0001>

<llo_original>
// kernel: tpu_custom_call.1
$region0: #{tpu_custom_call.1}
  #allocation0 [shape = 'u32[]', space=smem, size = 0x4, offset = 0x4, fixed_abs, tag = 'smem constant byte address 0x4 - core index']
  #allocation1 [shape = 'u32[144,128]{1,0:T(1,128)}', space=vmem, size = 0x12000, scoped, tag = 'internal scratch']
  %s0 = inlined_call_operand.vmem [shape: f32[4,8,32], index: 0, kind: input, shape index: {}]
  %s1 = inlined_call_operand.hbm [shape: f32[4,8,32], index: 1, kind: input, shape index: {}]
  %s2 = inlined_call_operand.vmem [shape: f32[4,1,8], index: 2, kind: input, shape index: {}]
  %s3 = inlined_call_operand.vmem [shape: f32[32,16], index: 3, kind: input, shape index: {}]
  %s4 = inlined_call_operand.hbm [shape: f32[64,64], index: 4, kind: input, shape index: {}]
  %s5 = inlined_call_operand.hbm [shape: f32[2,64,96], index: 5, kind: input, shape index: {}]
  %s6 = inlined_call_operand.vmem [shape: f32[2,1,96], index: 6, kind: input, shape index: {}]
  %s7 = inlined_call_operand.hbm [shape: f32[2,4,8,96], index: 7, kind: output, shape index: {}]
  %s8 = sld [smem:[#allocation0]]
  $region50: #{tpu_custom_call.1} parent=0
    _
  %s10 = ssub.s32 1, %s8
  %s11 = scalar_select 0, %s10, %s8
  $region1: #{tpu_custom_call.1} parent=0
    #allocation2 [shape = 'u8[16384]{0}', space=vmem, size = 0x4000, scoped, tag = 'input window, operand 1, single buffered']
    #allocation3 [shape = 's32[1]{0}', space=sflag, size = 0x4, scoped, tag = 'scoped memory for tpu_custom_call.1']
    #allocation4 [shape = 's32[1]{0}', space=sflag, size = 0x4, scoped, tag = 'scoped memory for tpu_custom_call.1']
    #allocation5 [shape = 'u8[32768]{0}', space=vmem, size = 0x8000, scoped, tag = 'input window, operand 4, single buffered']
    #allocation6 [shape = 's32[1]{0}', space=sflag, size = 0x4, scoped, tag = 'scoped memory for tpu_custom_call.1']
    #allocation7 [shape = 'u8[65536]{0}', space=vmem, size = 0x10000, scoped, tag = 'input window, operand 5, single buffered']
    #allocation8 [shape = 'u8[32768]{0}', space=vmem, size = 0x8000, scoped, tag = 'output window, operand 0, single buffered']
    %12 = vsyncpa [#allocation3], 0
    %13 = vsyncpa [#allocation6], 0
    %14 = vsyncpa [#allocation4], 0
    // Predicated region
    $region2: #{tpu_custom_call.1} parent=1 // pred_check
      _
    $region3: #{tpu_custom_call.1} parent=1 // pred_check_branch
      %16 = sbr.rel (0) target = $region5
    $region4: #{tpu_custom_call.1} parent=1 // pred_region
      _
    $region5: #{tpu_custom_call.1} parent=1 // pred_fallthru
      _
    // Predicated region
    $region6: #{tpu_custom_call.1} parent=1 // pred_check
      _
    $region7: #{tpu_custom_call.1} parent=1 // pred_check_branch
      %18 = sbr.rel (0) target = $region9
    $region8: #{tpu_custom_call.1} parent=1 // pred_region
      %s20 = ssub.s32 512, 512
      %21 = vsyncadd [#allocation3], %s20
      %s22 = sshll.u32 [#allocation2], 4
      %s23 = int_to_ptr.vmem [resolvable:$true] %s22
      %28 = dma.hbm_to_vmem [thread:$0]  %s1, 512, %s23, [#allocation3], 128, 128, 8
    $region9: #{tpu_custom_call.1} parent=1 // pred_fallthru
      _
    // Predicated region
    $region10: #{tpu_custom_call.1} parent=1 // pred_check
      _
    $region11: #{tpu_custom_call.1} parent=1 // pred_check_branch
      %30 = sbr.rel (0) target = $region13
    $region12: #{tpu_custom_call.1} parent=1 // pred_region
      _
    $region13: #{tpu_custom_call.1} parent=1 // pred_fallthru
      _
    // Predicated region
    $region14: #{tpu_custom_call.1} parent=1 // pred_check
      _
    $region15: #{tpu_custom_call.1} parent=1 // pred_check_branch
      %32 = sbr.rel (0) target = $region17
    $region16: #{tpu_custom_call.1} parent=1 // pred_region
      _
    $region17: #{tpu_custom_call.1} parent=1 // pred_fallthru
      _
    // Predicated region
    $region18: #{tpu_custom_call.1} parent=1 // pred_check
      _
    $region19: #{tpu_custom_call.1} parent=1 // pred_check_branch
      %34 = sbr.rel (0) target = $region21
    $region20: #{tpu_custom_call.1} parent=1 // pred_region
      %s36 = ssub.s32 1024, 1024
      %37 = vsyncadd [#allocation6], %s36
      %s38 = sshll.u32 [#allocation5], 4
      %s39 = int_to_ptr.vmem [resolvable:$true] %s38
      %44 = dma.hbm_to_vmem [thread:$0]  %s4, 1024, %s39, [#allocation6], 128, 128, 8
    $region21: #{tpu_custom_call.1} parent=1 // pred_fallthru
      _
    // Predicated region
    $region22: #{tpu_custom_call.1} parent=1 // pred_check
      _
    $region23: #{tpu_custom_call.1} parent=1 // pred_check_branch
      %46 = sbr.rel (0) target = $region25
    $region24: #{tpu_custom_call.1} parent=1 // pred_region
      %s48 = ssub.s32 2048, 2048
      %49 = vsyncadd [#allocation6], %s48
      %s50 = sshll.u32 [#allocation7], 4
      %s51 = int_to_ptr.vmem [resolvable:$true] %s50
      %56 = dma.hbm_to_vmem [thread:$0]  %s5, 2048, %s51, [#allocation6], 128, 128, 8
    $region25: #{tpu_custom_call.1} parent=1 // pred_fallthru
      _
    // Predicated region
    $region26: #{tpu_custom_call.1} parent=1 // pred_check
      _
    $region27: #{tpu_custom_call.1} parent=1 // pred_check_branch
      %58 = sbr.rel (0) target = $region29
    $region28: #{tpu_custom_call.1} parent=1 // pred_region
      _
    $region29: #{tpu_custom_call.1} parent=1 // pred_fallthru
      _
    // Predicated region
    $region30: #{tpu_custom_call.1} parent=1 // pred_check
      _
    $region31: #{tpu_custom_call.1} parent=1 // pred_check_branch
      %60 = sbr.rel (0) target = $region33
    $region32: #{tpu_custom_call.1} parent=1 // pred_region
      %61 = dma.done [#allocation3], 512
    $region33: #{tpu_custom_call.1} parent=1 // pred_fallthru
      _
    // Predicated region
    $region34: #{tpu_custom_call.1} parent=1 // pred_check
      _
    $region35: #{tpu_custom_call.1} parent=1 // pred_check_branch
      %63 = sbr.rel (0) target = $region37
    $region36: #{tpu_custom_call.1} parent=1 // pred_region
      %64 = dma.done [#allocation6], 1024
    $region37: #{tpu_custom_call.1} parent=1 // pred_fallthru
      _
    // Predicated region
    $region38: #{tpu_custom_call.1} parent=1 // pred_check
      _
    $region39: #{tpu_custom_call.1} parent=1 // pred_check_branch
      %66 = sbr.rel (0) target = $region41
    $region40: #{tpu_custom_call.1} parent=1 // pred_region
      %67 = dma.done [#allocation6], 2048
    $region41: #{tpu_custom_call.1} parent=1 // pred_fallthru
      _
    %v68 = vld [vmem:[%s0] sm:$0xff]
    %v69 = vld [vmem:[%s0 + $0x8] sm:$0xff]
    %v70 = vld [vmem:[%s0 + $0x10] sm:$0xff]
    %v71 = vld [vmem:[%s0 + $0x18] sm:$0xff]
    %v72 = vld [vmem:[#allocation2] sm:$0xff]
    %v73 = vld [vmem:[#allocation2 + $0x8] sm:$0xff]
    %v74 = vld [vmem:[#allocation2 + $0x10] sm:$0xff]
    %v75 = vld [vmem:[#allocation2 + $0x18] sm:$0xff]
    %v76 = vld [vmem:[%s2] sm:$0x1]
    %v77 = vld [vmem:[%s2 + $0x1] sm:$0x1]
    %v78 = vld [vmem:[%s2 + $0x2] sm:$0x1]
    %v79 = vld [vmem:[%s2 + $0x3] sm:$0x1]
    %v80 = vld [vmem:[%s3] sm:$0xff]
    %v81 = vld [vmem:[%s3 + $0x8] sm:$0xff]
    %v82 = vld [vmem:[%s3 + $0x10] sm:$0xff]
    %v83 = vld [vmem:[%s3 + $0x18] sm:$0xff]
    %vm84 = vcmask 261120
    %v86 = vsel %vm84, %v68, 0
    %v89 = vsel %vm84, %v69, 0
    %v92 = vsel %vm84, %v70, 0
    %v95 = vsel %vm84, %v71, 0
    %97 = vmatprep.subr.mxu0 0.0
    %98 = vmatpush1.msra.mxu0 %v80
    %99 = vmatprep.subr.mxu0 0.0
    %100 = vmatpush1.msra.mxu0 %v81
    %101 = vmatprep.subr.mxu0 0.0
    %102 = vmatpush1.msra.mxu0 %v82
    %103 = vmatprep.subr.mxu0 0.0
    %104 = vmatpush1.msra.mxu0 %v83
    %105 = vmatprep.subr.mxu0 0.0
    %106 = vmatpush1.msra.mxu0 0.0
    %107 = vmatprep.subr.mxu0 0.0
    %108 = vmatpush1.msra.mxu0 0.0
    %109 = vmatprep.subr.mxu0 0.0
    %110 = vmatpush1.msra.mxu0 0.0
    %111 = vmatprep.subr.mxu0 0.0
    %112 = vmatpush1.msra.mxu0 0.0
    %113 = vmatprep.subr.mxu0 0.0
    %114 = vmatpush1.msra.mxu0 0.0
    %115 = vmatprep.subr.mxu0 0.0
    %116 = vmatpush1.msra.mxu0 0.0
    %117 = vmatprep.subr.mxu0 0.0
    %118 = vmatpush1.msra.mxu0 0.0
    %119 = vmatprep.subr.mxu0 0.0
    %120 = vmatpush1.msra.mxu0 0.0
    %121 = vmatprep.subr.mxu0 0.0
    %122 = vmatpush1.msra.mxu0 0.0
    %123 = vmatprep.subr.mxu0 0.0
    %124 = vmatpush1.msra.mxu0 0.0
    %125 = vmatprep.subr.mxu0 0.0
    %126 = vmatpush1.msra.mxu0 0.0
    %127 = vmatprep.subr.mxu0 0.0
    %128 = vmatpush1.msra.mxu0 0.0
    %129 = vmatprep.subr.mxu0 0.0
    %130 = vmatpush1.msra.mxu0 0.0
    %131 = vmatprep.subr.mxu0 0.0
    %132 = vmatpush1.msra.mxu0 0.0
    %133 = vmatprep.subr.mxu0 0.0
    %134 = vmatpush1.msra.mxu0 0.0
    %135 = vmatprep.subr.mxu0 0.0
    %136 = vmatpush1.msra.mxu0 0.0
    %137 = vmatprep.subr.mxu0 0.0
    %138 = vmatpush1.msra.mxu0 0.0
    %139 = vmatprep.subr.mxu0 0.0
    %140 = vmatpush1.msra.mxu0 0.0
    %141 = vmatprep.subr.mxu0 0.0
    %142 = vmatpush1.msra.mxu0 0.0
    %143 = vmatprep.subr.mxu0 0.0
    %144 = vmatpush1.msra.mxu0 0.0
    %145 = vmatprep.subr.mxu0 0.0
    %146 = vmatpush1.msra.mxu0 0.0
    %147 = vmatprep.subr.mxu0 0.0
    %148 = vmatpush1.msra.mxu0 0.0
    %149 = vmatprep.subr.mxu0 0.0
    %150 = vmatpush1.msra.mxu0 0.0
    %151 = vmatprep.subr.mxu0 0.0
    %152 = vmatpush1.msra.mxu0 0.0
    %153 = vmatprep.subr.mxu0 0.0
    %154 = vmatpush1.msra.mxu0 0.0
    %155 = vmatprep.subr.mxu0 0.0
    %156 = vmatpush1.msra.mxu0 0.0
    %157 = vmatprep.subr.mxu0 0.0
    %158 = vmatpush1.msra.mxu0 0.0
    %159 = vmatprep.subr.mxu0 0.0
    %160 = vmatpush1.msra.mxu0 0.0
    %161 = vmatprep.mubr.f32.mxu0 0.0
    %162 = vmatmul.mubr.f32.gmra.mrb[0].mxu0 %v86
    %v163 = vpop.f32.mrb[0].mxu0
    %v164 = vadd.f32 0.0, %v163
    %v165 = vpop.f32.mrb[0].mxu0
    %166 = vmatprep.mubr.f32.mxu0 0.0
    %167 = vmatmul.mubr.f32.gmra.mrb[0].mxu0 %v89
    %v168 = vpop.f32.mrb[0].mxu0
    %v169 = vadd.f32 0.0, %v168
    %v170 = vpop.f32.mrb[0].mxu0
    %171 = vmatprep.mubr.f32.mxu0 0.0
    %172 = vmatmul.mubr.f32.gmra.mrb[0].mxu0 %v92
    %v173 = vpop.f32.mrb[0].mxu0
    %v174 = vadd.f32 0.0, %v173
    %v175 = vpop.f32.mrb[0].mxu0
    %176 = vmatprep.mubr.f32.mxu0 0.0
    %177 = vmatmul.mubr.f32.gmra.mrb[0].mxu0 %v95
    %v178 = vpop.f32.mrb[0].mxu0
    %v179 = vadd.f32 0.0, %v178
    %v180 = vpop.f32.mrb[0].mxu0
    %181 = vdwg.mxu0
    %v182 = vmax.f32 %v164, 0.0
    %v183 = vmax.f32 %v169, 0.0
    %v184 = vmax.f32 %v174, 0.0
    %v185 = vmax.f32 %v179, 0.0
    %v187 = vsel %vm84, %v72, 0
    %v190 = vsel %vm84, %v73, 0
    %v193 = vsel %vm84, %v74, 0
    %v196 = vsel %vm84, %v75, 0
    %198 = vmatprep.subr.mxu0 0.0
    %199 = vmatpush1.msra.mxu0 %v80
    %200 = vmatprep.subr.mxu0 0.0
    %201 = vmatpush1.msra.mxu0 %v81
    %202 = vmatprep.subr.mxu0 0.0
    %203 = vmatpush1.msra.mxu0 %v82
    %204 = vmatprep.subr.mxu0 0.0
    %205 = vmatpush1.msra.mxu0 %v83
    %206 = vmatprep.subr.mxu0 0.0
    %207 = vmatpush1.msra.mxu0 0.0
    %208 = vmatprep.subr.mxu0 0.0
    %209 = vmatpush1.msra.mxu0 0.0
    %210 = vmatprep.subr.mxu0 0.0
    %211 = vmatpush1.msra.mxu0 0.0
    %212 = vmatprep.subr.mxu0 0.0
    %213 = vmatpush1.msra.mxu0 0.0
    %214 = vmatprep.subr.mxu0 0.0
    %215 = vmatpush1.msra.mxu0 0.0
    %216 = vmatprep.subr.mxu0 0.0
    %217 = vmatpush1.msra.mxu0 0.0
    %218 = vmatprep.subr.mxu0 0.0
    %219 = vmatpush1.msra.mxu0 0.0
    %220 = vmatprep.subr.mxu0 0.0
    %221 = vmatpush1.msra.mxu0 0.0
    %222 = vmatprep.subr.mxu0 0.0
    %223 = vmatpush1.msra.mxu0 0.0
    %224 = vmatprep.subr.mxu0 0.0
    %225 = vmatpush1.msra.mxu0 0.0
    %226 = vmatprep.subr.mxu0 0.0
    %227 = vmatpush1.msra.mxu0 0.0
    %228 = vmatprep.subr.mxu0 0.0
    %229 = vmatpush1.msra.mxu0 0.0
    %230 = vmatprep.subr.mxu0 0.0
    %231 = vmatpush1.msra.mxu0 0.0
    %232 = vmatprep.subr.mxu0 0.0
    %233 = vmatpush1.msra.mxu0 0.0
    %234 = vmatprep.subr.mxu0 0.0
    %235 = vmatpush1.msra.mxu0 0.0
    %236 = vmatprep.subr.mxu0 0.0
    %237 = vmatpush1.msra.mxu0 0.0
    %238 = vmatprep.subr.mxu0 0.0
    %239 = vmatpush1.msra.mxu0 0.0
    %240 = vmatprep.subr.mxu0 0.0
    %241 = vmatpush1.msra.mxu0 0.0
    %242 = vmatprep.subr.mxu0 0.0
    %243 = vmatpush1.msra.mxu0 0.0
    %244 = vmatprep.subr.mxu0 0.0
    %245 = vmatpush1.msra.mxu0 0.0
    %246 = vmatprep.subr.mxu0 0.0
    %247 = vmatpush1.msra.mxu0 0.0
    %248 = vmatprep.subr.mxu0 0.0
    %249 = vmatpush1.msra.mxu0 0.0
    %250 = vmatprep.subr.mxu0 0.0
    %251 = vmatpush1.msra.mxu0 0.0
    %252 = vmatprep.subr.mxu0 0.0
    %253 = vmatpush1.msra.mxu0 0.0
    %254 = vmatprep.subr.mxu0 0.0
    %255 = vmatpush1.msra.mxu0 0.0
    %256 = vmatprep.subr.mxu0 0.0
    %257 = vmatpush1.msra.mxu0 0.0
    %258 = vmatprep.subr.mxu0 0.0
    %259 = vmatpush1.msra.mxu0 0.0
    %260 = vmatprep.subr.mxu0 0.0
    %261 = vmatpush1.msra.mxu0 0.0
    %262 = vmatprep.mubr.f32.mxu0 0.0
    %263 = vmatmul.mubr.f32.gmra.mrb[0].mxu0 %v187
    %v264 = vpop.f32.mrb[0].mxu0
    %v265 = vadd.f32 0.0, %v264
    %v266 = vpop.f32.mrb[0].mxu0
    %267 = vmatprep.mubr.f32.mxu0 0.0
    %268 = vmatmul.mubr.f32.gmra.mrb[0].mxu0 %v190
    %v269 = vpop.f32.mrb[0].mxu0
    %v270 = vadd.f32 0.0, %v269
    %v271 = vpop.f32.mrb[0].mxu0
    %272 = vmatprep.mubr.f32.mxu0 0.0
    %273 = vmatmul.mubr.f32.gmra.mrb[0].mxu0 %v193
    %v274 = vpop.f32.mrb[0].mxu0
    %v275 = vadd.f32 0.0, %v274
    %v276 = vpop.f32.mrb[0].mxu0
    %277 = vmatprep.mubr.f32.mxu0 0.0
    %278 = vmatmul.mubr.f32.gmra.mrb[0].mxu0 %v196
    %v279 = vpop.f32.mrb[0].mxu0
    %v280 = vadd.f32 0.0, %v279
    %v281 = vpop.f32.mrb[0].mxu0
    %282 = vdwg.mxu0
    %v283 = vmax.f32 %v265, 0.0
    %v284 = vmax.f32 %v270, 0.0
    %v285 = vmax.f32 %v275, 0.0
    %v286 = vmax.f32 %v280, 0.0
    %vm287 = vcmask 130048
    %v289 = vsel %vm287, %v182, 0
    %v292 = vsel %vm287, %v283, 0
    %294 = vmatprep.subr.mxu0 0.0
    %295 = vmatpush1.xpose.msra.mxu0 %v292
    %296 = vmatprep.subr.mxu0 0.0
    %297 = vmatpush1.xpose.msra.mxu0 0.0
    %298 = vmatprep.subr.mxu0 0.0
    %299 = vmatpush1.xpose.msra.mxu0 0.0
    %300 = vmatprep.subr.mxu0 0.0
    %301 = vmatpush1.xpose.msra.mxu0 0.0
    %302 = vmatprep.subr.mxu0 0.0
    %303 = vmatpush1.xpose.msra.mxu0 0.0
    %304 = vmatprep.subr.mxu0 0.0
    %305 = vmatpush1.xpose.msra.mxu0 0.0
    %306 = vmatprep.subr.mxu0 0.0
    %307 = vmatpush1.xpose.msra.mxu0 0.0
    %308 = vmatprep.subr.mxu0 0.0
    %309 = vmatpush1.xpose.msra.mxu0 0.0
    %310 = vmatprep.subr.mxu0 0.0
    %311 = vmatpush1.xpose.msra.mxu0 0.0
    %312 = vmatprep.subr.mxu0 0.0
    %313 = vmatpush1.xpose.msra.mxu0 0.0
    %314 = vmatprep.subr.mxu0 0.0
    %315 = vmatpush1.xpose.msra.mxu0 0.0
    %316 = vmatprep.subr.mxu0 0.0
    %317 = vmatpush1.xpose.msra.mxu0 0.0
    %318 = vmatprep.subr.mxu0 0.0
    %319 = vmatpush1.xpose.msra.mxu0 0.0
    %320 = vmatprep.subr.mxu0 0.0
    %321 = vmatpush1.xpose.msra.mxu0 0.0
    %322 = vmatprep.subr.mxu0 0.0
    %323 = vmatpush1.xpose.msra.mxu0 0.0
    %324 = vmatprep.subr.mxu0 0.0
    %325 = vmatpush1.xpose.msra.mxu0 0.0
    %326 = vmatprep.subr.mxu0 0.0
    %327 = vmatpush1.xpose.msra.mxu0 0.0
    %328 = vmatprep.subr.mxu0 0.0
    %329 = vmatpush1.xpose.msra.mxu0 0.0
    %330 = vmatprep.subr.mxu0 0.0
    %331 = vmatpush1.xpose.msra.mxu0 0.0
    %332 = vmatprep.subr.mxu0 0.0
    %333 = vmatpush1.xpose.msra.mxu0 0.0
    %334 = vmatprep.subr.mxu0 0.0
    %335 = vmatpush1.xpose.msra.mxu0 0.0
    %336 = vmatprep.subr.mxu0 0.0
    %337 = vmatpush1.xpose.msra.mxu0 0.0
    %338 = vmatprep.subr.mxu0 0.0
    %339 = vmatpush1.xpose.msra.mxu0 0.0
    %340 = vmatprep.subr.mxu0 0.0
    %341 = vmatpush1.xpose.msra.mxu0 0.0
    %342 = vmatprep.subr.mxu0 0.0
    %343 = vmatpush1.xpose.msra.mxu0 0.0
    %344 = vmatprep.subr.mxu0 0.0
    %345 = vmatpush1.xpose.msra.mxu0 0.0
    %346 = vmatprep.subr.mxu0 0.0
    %347 = vmatpush1.xpose.msra.mxu0 0.0
    %348 = vmatprep.subr.mxu0 0.0
    %349 = vmatpush1.xpose.msra.mxu0 0.0
    %350 = vmatprep.subr.mxu0 0.0
    %351 = vmatpush1.xpose.msra.mxu0 0.0
    %352 = vmatprep.subr.mxu0 0.0
    %353 = vmatpush1.xpose.msra.mxu0 0.0
    %354 = vmatprep.subr.mxu0 0.0
    %355 = vmatpush1.xpose.msra.mxu0 0.0
    %356 = vmatprep.subr.mxu0 0.0
    %357 = vmatpush1.xpose.msra.mxu0 0.0
    %358 = vmatprep.mubr.f32.mxu0 0.0
    %359 = vmatmul.mubr.f32.gmra.mrb[0].mxu0 %v289
    %v360 = vpop.f32.mrb[0].mxu0
    %v361 = vadd.f32 0.0, %v360
    %v362 = vpop.f32.mrb[0].mxu0
    %363 = vdwg.mxu0
    %v365 = vsel %vm287, %v183, 0
    %v368 = vsel %vm287, %v284, 0
    %370 = vmatprep.subr.mxu0 0.0
    %371 = vmatpush1.xpose.msra.mxu0 %v368
    %372 = vmatprep.subr.mxu0 0.0
    %373 = vmatpush1.xpose.msra.mxu0 0.0
    %374 = vmatprep.subr.mxu0 0.0
    %375 = vmatpush1.xpose.msra.mxu0 0.0
    %376 = vmatprep.subr.mxu0 0.0
    %377 = vmatpush1.xpose.msra.mxu0 0.0
    %378 = vmatprep.subr.mxu0 0.0
    %379 = vmatpush1.xpose.msra.mxu0 0.0
    %380 = vmatprep.subr.mxu0 0.0
    %381 = vmatpush1.xpose.msra.mxu0 0.0
    %382 = vmatprep.subr.mxu0 0.0
    %383 = vmatpush1.xpose.msra.mxu0 0.0
    %384 = vmatprep.subr.mxu0 0.0
    %385 = vmatpush1.xpose.msra.mxu0 0.0
    %386 = vmatprep.subr.mxu0 0.0
    %387 = vmatpush1.xpose.msra.mxu0 0.0
    %388 = vmatprep.subr.mxu0 0.0
    %389 = vmatpush1.xpose.msra.mxu0 0.0
    %390 = vmatprep.subr.mxu0 0.0
    %391 = vmatpush1.xpose.msra.mxu0 0.0
    %392 = vmatprep.subr.mxu0 0.0
    %393 = vmatpush1.xpose.msra.mxu0 0.0
    %394 = vmatprep.subr.mxu0 0.0
    %395 = vmatpush1.xpose.msra.mxu0 0.0
    %396 = vmatprep.subr.mxu0 0.0
    %397 = vmatpush1.xpose.msra.mxu0 0.0
    %398 = vmatprep.subr.mxu0 0.0
    %399 = vmatpush1.xpose.msra.mxu0 0.0
    %400 = vmatprep.subr.mxu0 0.0
    %401 = vmatpush1.xpose.msra.mxu0 0.0
    %402 = vmatprep.subr.mxu0 0.0
    %403 = vmatpush1.xpose.msra.mxu0 0.0
    %404 = vmatprep.subr.mxu0 0.0
    %405 = vmatpush1.xpose.msra.mxu0 0.0
    %406 = vmatprep.subr.mxu0 0.0
    %407 = vmatpush1.xpose.msra.mxu0 0.0
    %408 = vmatprep.subr.mxu0 0.0
    %409 = vmatpush1.xpose.msra.mxu0 0.0
    %410 = vmatprep.subr.mxu0 0.0
    %411 = vmatpush1.xpose.msra.mxu0 0.0
    %412 = vmatprep.subr.mxu0 0.0
    %413 = vmatpush1.xpose.msra.mxu0 0.0
    %414 = vmatprep.subr.mxu0 0.0
    %415 = vmatpush1.xpose.msra.mxu0 0.0
    %416 = vmatprep.subr.mxu0 0.0
    %417 = vmatpush1.xpose.msra.mxu0 0.0
    %418 = vmatprep.subr.mxu0 0.0
    %419 = vmatpush1.xpose.msra.mxu0 0.0
    %420 = vmatprep.subr.mxu0 0.0
    %421 = vmatpush1.xpose.msra.mxu0 0.0
    %422 = vmatprep.subr.mxu0 0.0
    %423 = vmatpush1.xpose.msra.mxu0 0.0
    %424 = vmatprep.subr.mxu0 0.0
    %425 = vmatpush1.xpose.msra.mxu0 0.0
    %426 = vmatprep.subr.mxu0 0.0
    %427 = vmatpush1.xpose.msra.mxu0 0.0
    %428 = vmatprep.subr.mxu0 0.0
    %429 = vmatpush1.xpose.msra.mxu0 0.0
    %430 = vmatprep.subr.mxu0 0.0
    %431 = vmatpush1.xpose.msra.mxu0 0.0
    %432 = vmatprep.subr.mxu0 0.0
    %433 = vmatpush1.xpose.msra.mxu0 0.0
    %434 = vmatprep.mubr.f32.mxu0 0.0
    %435 = vmatmul.mubr.f32.gmra.mrb[0].mxu0 %v365
    %v436 = vpop.f32.mrb[0].mxu0
    %v437 = vadd.f32 0.0, %v436
    %v438 = vpop.f32.mrb[0].mxu0
    %439 = vdwg.mxu0
    %v441 = vsel %vm287, %v184, 0
    %v444 = vsel %vm287, %v285, 0
    %446 = vmatprep.subr.mxu0 0.0
    %447 = vmatpush1.xpose.msra.mxu0 %v444
    %448 = vmatprep.subr.mxu0 0.0
    %449 = vmatpush1.xpose.msra.mxu0 0.0
    %450 = vmatprep.subr.mxu0 0.0
    %451 = vmatpush1.xpose.msra.mxu0 0.0
    %452 = vmatprep.subr.mxu0 0.0
    %453 = vmatpush1.xpose.msra.mxu0 0.0
    %454 = vmatprep.subr.mxu0 0.0
    %455 = vmatpush1.xpose.msra.mxu0 0.0
    %456 = vmatprep.subr.mxu0 0.0
    %457 = vmatpush1.xpose.msra.mxu0 0.0
    %458 = vmatprep.subr.mxu0 0.0
    %459 = vmatpush1.xpose.msra.mxu0 0.0
    %460 = vmatprep.subr.mxu0 0.0
    %461 = vmatpush1.xpose.msra.mxu0 0.0
    %462 = vmatprep.subr.mxu0 0.0
    %463 = vmatpush1.xpose.msra.mxu0 0.0
    %464 = vmatprep.subr.mxu0 0.0
    %465 = vmatpush1.xpose.msra.mxu0 0.0
    %466 = vmatprep.subr.mxu0 0.0
    %467 = vmatpush1.xpose.msra.mxu0 0.0
    %468 = vmatprep.subr.mxu0 0.0
    %469 = vmatpush1.xpose.msra.mxu0 0.0
    %470 = vmatprep.subr.mxu0 0.0
    %471 = vmatpush1.xpose.msra.mxu0 0.0
    %472 = vmatprep.subr.mxu0 0.0
    %473 = vmatpush1.xpose.msra.mxu0 0.0
    %474 = vmatprep.subr.mxu0 0.0
    %475 = vmatpush1.xpose.msra.mxu0 0.0
    %476 = vmatprep.subr.mxu0 0.0
    %477 = vmatpush1.xpose.msra.mxu0 0.0
    %478 = vmatprep.subr.mxu0 0.0
    %479 = vmatpush1.xpose.msra.mxu0 0.0
    %480 = vmatprep.subr.mxu0 0.0
    %481 = vmatpush1.xpose.msra.mxu0 0.0
    %482 = vmatprep.subr.mxu0 0.0
    %483 = vmatpush1.xpose.msra.mxu0 0.0
    %484 = vmatprep.subr.mxu0 0.0
    %485 = vmatpush1.xpose.msra.mxu0 0.0
    %486 = vmatprep.subr.mxu0 0.0
    %487 = vmatpush1.xpose.msra.mxu0 0.0
    %488 = vmatprep.subr.mxu0 0.0
    %489 = vmatpush1.xpose.msra.mxu0 0.0
    %490 = vmatprep.subr.mxu0 0.0
    %491 = vmatpush1.xpose.msra.mxu0 0.0
    %492 = vmatprep.subr.mxu0 0.0
    %493 = vmatpush1.xpose.msra.mxu0 0.0
    %494 = vmatprep.subr.mxu0 0.0
    %495 = vmatpush1.xpose.msra.mxu0 0.0
    %496 = vmatprep.subr.mxu0 0.0
    %497 = vmatpush1.xpose.msra.mxu0 0.0
    %498 = vmatprep.subr.mxu0 0.0
    %499 = vmatpush1.xpose.msra.mxu0 0.0
    %500 = vmatprep.subr.mxu0 0.0
    %501 = vmatpush1.xpose.msra.mxu0 0.0
    %502 = vmatprep.subr.mxu0 0.0
    %503 = vmatpush1.xpose.msra.mxu0 0.0
    %504 = vmatprep.subr.mxu0 0.0
    %505 = vmatpush1.xpose.msra.mxu0 0.0
    %506 = vmatprep.subr.mxu0 0.0
    %507 = vmatpush1.xpose.msra.mxu0 0.0
    %508 = vmatprep.subr.mxu0 0.0
    %509 = vmatpush1.xpose.msra.mxu0 0.0
    %510 = vmatprep.mubr.f32.mxu0 0.0
    %511 = vmatmul.mubr.f32.gmra.mrb[0].mxu0 %v441
    %v512 = vpop.f32.mrb[0].mxu0
    %v513 = vadd.f32 0.0, %v512
    %v514 = vpop.f32.mrb[0].mxu0
    %515 = vdwg.mxu0
    %v517 = vsel %vm287, %v185, 0
    %v520 = vsel %vm287, %v286, 0
    %522 = vmatprep.subr.mxu0 0.0
    %523 = vmatpush1.xpose.msra.mxu0 %v520
    %524 = vmatprep.subr.mxu0 0.0
    %525 = vmatpush1.xpose.msra.mxu0 0.0
    %526 = vmatprep.subr.mxu0 0.0
    %527 = vmatpush1.xpose.msra.mxu0 0.0
    %528 = vmatprep.subr.mxu0 0.0
    %529 = vmatpush1.xpose.msra.mxu0 0.0
    %530 = vmatprep.subr.mxu0 0.0
    %531 = vmatpush1.xpose.msra.mxu0 0.0
    %532 = vmatprep.subr.mxu0 0.0
    %533 = vmatpush1.xpose.msra.mxu0 0.0
    %534 = vmatprep.subr.mxu0 0.0
    %535 = vmatpush1.xpose.msra.mxu0 0.0
    %536 = vmatprep.subr.mxu0 0.0
    %537 = vmatpush1.xpose.msra.mxu0 0.0
    %538 = vmatprep.subr.mxu0 0.0
    %539 = vmatpush1.xpose.msra.mxu0 0.0
    %540 = vmatprep.subr.mxu0 0.0
    %541 = vmatpush1.xpose.msra.mxu0 0.0
    %542 = vmatprep.subr.mxu0 0.0
    %543 = vmatpush1.xpose.msra.mxu0 0.0
    %544 = vmatprep.subr.mxu0 0.0
    %545 = vmatpush1.xpose.msra.mxu0 0.0
    %546 = vmatprep.subr.mxu0 0.0
    %547 = vmatpush1.xpose.msra.mxu0 0.0
    %548 = vmatprep.subr.mxu0 0.0
    %549 = vmatpush1.xpose.msra.mxu0 0.0
    %550 = vmatprep.subr.mxu0 0.0
    %551 = vmatpush1.xpose.msra.mxu0 0.0
    %552 = vmatprep.subr.mxu0 0.0
    %553 = vmatpush1.xpose.msra.mxu0 0.0
    %554 = vmatprep.subr.mxu0 0.0
    %555 = vmatpush1.xpose.msra.mxu0 0.0
    %556 = vmatprep.subr.mxu0 0.0
    %557 = vmatpush1.xpose.msra.mxu0 0.0
    %558 = vmatprep.subr.mxu0 0.0
    %559 = vmatpush1.xpose.msra.mxu0 0.0
    %560 = vmatprep.subr.mxu0 0.0
    %561 = vmatpush1.xpose.msra.mxu0 0.0
    %562 = vmatprep.subr.mxu0 0.0
    %563 = vmatpush1.xpose.msra.mxu0 0.0
    %564 = vmatprep.subr.mxu0 0.0
    %565 = vmatpush1.xpose.msra.mxu0 0.0
    %566 = vmatprep.subr.mxu0 0.0
    %567 = vmatpush1.xpose.msra.mxu0 0.0
    %568 = vmatprep.subr.mxu0 0.0
    %569 = vmatpush1.xpose.msra.mxu0 0.0
    %570 = vmatprep.subr.mxu0 0.0
    %571 = vmatpush1.xpose.msra.mxu0 0.0
    %572 = vmatprep.subr.mxu0 0.0
    %573 = vmatpush1.xpose.msra.mxu0 0.0
    %574 = vmatprep.subr.mxu0 0.0
    %575 = vmatpush1.xpose.msra.mxu0 0.0
    %576 = vmatprep.subr.mxu0 0.0
    %577 = vmatpush1.xpose.msra.mxu0 0.0
    %578 = vmatprep.subr.mxu0 0.0
    %579 = vmatpush1.xpose.msra.mxu0 0.0
    %580 = vmatprep.subr.mxu0 0.0
    %581 = vmatpush1.xpose.msra.mxu0 0.0
    %582 = vmatprep.subr.mxu0 0.0
    %583 = vmatpush1.xpose.msra.mxu0 0.0
    %584 = vmatprep.subr.mxu0 0.0
    %585 = vmatpush1.xpose.msra.mxu0 0.0
    %586 = vmatprep.mubr.f32.mxu0 0.0
    %587 = vmatmul.mubr.f32.gmra.mrb[0].mxu0 %v517
    %v588 = vpop.f32.mrb[0].mxu0
    %v589 = vadd.f32 0.0, %v588
    %v590 = vpop.f32.mrb[0].mxu0
    %591 = vdwg.mxu0
    %v592 = vmul.f32 %v361, 0.25
    %v593 = vmul.f32 %v437, 0.25
    %v594 = vmul.f32 %v513, 0.25
    %v595 = vmul.f32 %v589, 0.25
    %v600 = vlaneseq
    %v601 = vshrl.u32 %v600, 7
    %v602 = vsub.s32 0, %v601
    %v603 = vrot.slane %v76, %v602
    %v604 = vlaneseq
    %v605 = vshrl.u32 %v604, 7
    %v606 = vsub.s32 0, %v605
    %v607 = vrot.slane %v77, %v606
    %v608 = vlaneseq
    %v609 = vshrl.u32 %v608, 7
    %v610 = vsub.s32 0, %v609
    %v611 = vrot.slane %v78, %v610
    %v612 = vlaneseq
    %v613 = vshrl.u32 %v612, 7
    %v614 = vsub.s32 0, %v613
    %v615 = vrot.slane %v79, %v614
    %v620 = vmul.f32 %v592, %v603
    %v621 = vmul.f32 %v593, %v607
    %v622 = vmul.f32 %v594, %v611
    %v623 = vmul.f32 %v595, %v615
    %vm624 = vcmask 64512
    %v625 = vsel %vm624, %v620, -inf
    %626 = vmax.xlane.f32.xlu0 %v625
    %v627 = vpop.xlane.xlu0 %626
    %v628 = vsel %vm624, %v621, -inf
    %629 = vmax.xlane.f32.xlu0 %v628
    %v630 = vpop.xlane.xlu0 %629
    %v631 = vsel %vm624, %v622, -inf
    %632 = vmax.xlane.f32.xlu0 %v631
    %v633 = vpop.xlane.xlu0 %632
    %v634 = vsel %vm624, %v623, -inf
    %635 = vmax.xlane.f32.xlu0 %v634
    %v636 = vpop.xlane.xlu0 %635
    %v637 = vsub.f32 %v620, %v627
    %v638 = vsub.f32 %v621, %v630
    %v639 = vsub.f32 %v622, %v633
    %v640 = vsub.f32 %v623, %v636
    %v641 = vmul.f32 %v637, 1.442695
    %v642 = vpow.pop %v641
    %v643 = vmul.f32 %v638, 1.442695
    %v644 = vpow.pop %v643
    %v645 = vmul.f32 %v639, 1.442695
    %v646 = vpow.pop %v645
    %v647 = vmul.f32 %v640, 1.442695
    %v648 = vpow.pop %v647
    %v649 = vmul.f32 %v642, %v603
    %v650 = vmul.f32 %v644, %v607
    %v651 = vmul.f32 %v646, %v611
    %v652 = vmul.f32 %v648, %v615
    %v653 = vsel %vm624, %v649, 0.0
    %654 = vadd.xlane.f32.xlu0 %v653
    %v655 = vpop.xlane.xlu0 %654
    %v656 = vsel %vm624, %v650, 0.0
    %657 = vadd.xlane.f32.xlu0 %v656
    %v658 = vpop.xlane.xlu0 %657
    %v659 = vsel %vm624, %v651, 0.0
    %660 = vadd.xlane.f32.xlu0 %v659
    %v661 = vpop.xlane.xlu0 %660
    %v662 = vsel %vm624, %v652, 0.0
    %663 = vadd.xlane.f32.xlu0 %v662
    %v664 = vpop.xlane.xlu0 %663
    %v665 = vadd.f32 %v655, 1e-13
    %v666 = vadd.f32 %v658, 1e-13
    %v667 = vadd.f32 %v661, 1e-13
    %v668 = vadd.f32 %v664, 1e-13
    %v669 = vrcp.pop %v665
    %v670 = vrcp.pop %v666
    %v671 = vrcp.pop %v667
    %v672 = vrcp.pop %v668
    %v673 = vmul.f32 %v649, %v669
    %v674 = vmul.f32 %v650, %v670
    %v675 = vmul.f32 %v651, %v671
    %v676 = vmul.f32 %v652, %v672
    %v678 = vsel %vm624, %v673, 0
    %680 = vmatprep.subr.mxu0 0.0
    %681 = vmatpush1.msra.mxu0 %v72
    %682 = vmatprep.subr.mxu0 0.0
    %683 = vmatpush1.msra.mxu0 0.0
    %684 = vmatprep.subr.mxu0 0.0
    %685 = vmatpush1.msra.mxu0 0.0
    %686 = vmatprep.subr.mxu0 0.0
    %687 = vmatpush1.msra.mxu0 0.0
    %688 = vmatprep.subr.mxu0 0.0
    %689 = vmatpush1.msra.mxu0 0.0
    %690 = vmatprep.subr.mxu0 0.0
    %691 = vmatpush1.msra.mxu0 0.0
    %692 = vmatprep.subr.mxu0 0.0
    %693 = vmatpush1.msra.mxu0 0.0
    %694 = vmatprep.subr.mxu0 0.0
    %695 = vmatpush1.msra.mxu0 0.0
    %696 = vmatprep.subr.mxu0 0.0
    %697 = vmatpush1.msra.mxu0 0.0
    %698 = vmatprep.subr.mxu0 0.0
    %699 = vmatpush1.msra.mxu0 0.0
    %700 = vmatprep.subr.mxu0 0.0
    %701 = vmatpush1.msra.mxu0 0.0
    %702 = vmatprep.subr.mxu0 0.0
    %703 = vmatpush1.msra.mxu0 0.0
    %704 = vmatprep.subr.mxu0 0.0
    %705 = vmatpush1.msra.mxu0 0.0
    %706 = vmatprep.subr.mxu0 0.0
    %707 = vmatpush1.msra.mxu0 0.0
    %708 = vmatprep.subr.mxu0 0.0
    %709 = vmatpush1.msra.mxu0 0.0
    %710 = vmatprep.subr.mxu0 0.0
    %711 = vmatpush1.msra.mxu0 0.0
    %712 = vmatprep.subr.mxu0 0.0
    %713 = vmatpush1.msra.mxu0 0.0
    %714 = vmatprep.subr.mxu0 0.0
    %715 = vmatpush1.msra.mxu0 0.0
    %716 = vmatprep.subr.mxu0 0.0
    %717 = vmatpush1.msra.mxu0 0.0
    %718 = vmatprep.subr.mxu0 0.0
    %719 = vmatpush1.msra.mxu0 0.0
    %720 = vmatprep.subr.mxu0 0.0
    %721 = vmatpush1.msra.mxu0 0.0
    %722 = vmatprep.subr.mxu0 0.0
    %723 = vmatpush1.msra.mxu0 0.0
    %724 = vmatprep.subr.mxu0 0.0
    %725 = vmatpush1.msra.mxu0 0.0
    %726 = vmatprep.subr.mxu0 0.0
    %727 = vmatpush1.msra.mxu0 0.0
    %728 = vmatprep.subr.mxu0 0.0
    %729 = vmatpush1.msra.mxu0 0.0
    %730 = vmatprep.subr.mxu0 0.0
    %731 = vmatpush1.msra.mxu0 0.0
    %732 = vmatprep.subr.mxu0 0.0
    %733 = vmatpush1.msra.mxu0 0.0
    %734 = vmatprep.subr.mxu0 0.0
    %735 = vmatpush1.msra.mxu0 0.0
    %736 = vmatprep.subr.mxu0 0.0
    %737 = vmatpush1.msra.mxu0 0.0
    %738 = vmatprep.subr.mxu0 0.0
    %739 = vmatpush1.msra.mxu0 0.0
    %740 = vmatprep.subr.mxu0 0.0
    %741 = vmatpush1.msra.mxu0 0.0
    %742 = vmatprep.subr.mxu0 0.0
    %743 = vmatpush1.msra.mxu0 0.0
    %744 = vmatprep.mubr.f32.mxu0 0.0
    %745 = vmatmul.mubr.f32.gmra.mrb[0].mxu0 %v678
    %v746 = vpop.f32.mrb[0].mxu0
    %v747 = vadd.f32 0.0, %v746
    %v748 = vpop.f32.mrb[0].mxu0
    %749 = vdwg.mxu0
    %v751 = vsel %vm624, %v674, 0
    %753 = vmatprep.subr.mxu0 0.0
    %754 = vmatpush1.msra.mxu0 %v73
    %755 = vmatprep.subr.mxu0 0.0
    %756 = vmatpush1.msra.mxu0 0.0
    %757 = vmatprep.subr.mxu0 0.0
    %758 = vmatpush1.msra.mxu0 0.0
    %759 = vmatprep.subr.mxu0 0.0
    %760 = vmatpush1.msra.mxu0 0.0
    %761 = vmatprep.subr.mxu0 0.0
    %762 = vmatpush1.msra.mxu0 0.0
    %763 = vmatprep.subr.mxu0 0.0
    %764 = vmatpush1.msra.mxu0 0.0
    %765 = vmatprep.subr.mxu0 0.0
    %766 = vmatpush1.msra.mxu0 0.0
    %767 = vmatprep.subr.mxu0 0.0
    %768 = vmatpush1.msra.mxu0 0.0
    %769 = vmatprep.subr.mxu0 0.0
    %770 = vmatpush1.msra.mxu0 0.0
    %771 = vmatprep.subr.mxu0 0.0
    %772 = vmatpush1.msra.mxu0 0.0
    %773 = vmatprep.subr.mxu0 0.0
    %774 = vmatpush1.msra.mxu0 0.0
    %775 = vmatprep.subr.mxu0 0.0
    %776 = vmatpush1.msra.mxu0 0.0
    %777 = vmatprep.subr.mxu0 0.0
    %778 = vmatpush1.msra.mxu0 0.0
    %779 = vmatprep.subr.mxu0 0.0
    %780 = vmatpush1.msra.mxu0 0.0
    %781 = vmatprep.subr.mxu0 0.0
    %782 = vmatpush1.msra.mxu0 0.0
    %783 = vmatprep.subr.mxu0 0.0
    %784 = vmatpush1.msra.mxu0 0.0
    %785 = vmatprep.subr.mxu0 0.0
    %786 = vmatpush1.msra.mxu0 0.0
    %787 = vmatprep.subr.mxu0 0.0
    %788 = vmatpush1.msra.mxu0 0.0
    %789 = vmatprep.subr.mxu0 0.0
    %790 = vmatpush1.msra.mxu0 0.0
    %791 = vmatprep.subr.mxu0 0.0
    %792 = vmatpush1.msra.mxu0 0.0
    %793 = vmatprep.subr.mxu0 0.0
    %794 = vmatpush1.msra.mxu0 0.0
    %795 = vmatprep.subr.mxu0 0.0
    %796 = vmatpush1.msra.mxu0 0.0
    %797 = vmatprep.subr.mxu0 0.0
    %798 = vmatpush1.msra.mxu0 0.0
    %799 = vmatprep.subr.mxu0 0.0
    %800 = vmatpush1.msra.mxu0 0.0
    %801 = vmatprep.subr.mxu0 0.0
    %802 = vmatpush1.msra.mxu0 0.0
    %803 = vmatprep.subr.mxu0 0.0
    %804 = vmatpush1.msra.mxu0 0.0
    %805 = vmatprep.subr.mxu0 0.0
    %806 = vmatpush1.msra.mxu0 0.0
    %807 = vmatprep.subr.mxu0 0.0
    %808 = vmatpush1.msra.mxu0 0.0
    %809 = vmatprep.subr.mxu0 0.0
    %810 = vmatpush1.msra.mxu0 0.0
    %811 = vmatprep.subr.mxu0 0.0
    %812 = vmatpush1.msra.mxu0 0.0
    %813 = vmatprep.subr.mxu0 0.0
    %814 = vmatpush1.msra.mxu0 0.0
    %815 = vmatprep.subr.mxu0 0.0
    %816 = vmatpush1.msra.mxu0 0.0
    %817 = vmatprep.mubr.f32.mxu0 0.0
    %818 = vmatmul.mubr.f32.gmra.mrb[0].mxu0 %v751
    %v819 = vpop.f32.mrb[0].mxu0
    %v820 = vadd.f32 0.0, %v819
    %v821 = vpop.f32.mrb[0].mxu0
    %822 = vdwg.mxu0
    %v824 = vsel %vm624, %v675, 0
    %826 = vmatprep.subr.mxu0 0.0
    %827 = vmatpush1.msra.mxu0 %v74
    %828 = vmatprep.subr.mxu0 0.0
    %829 = vmatpush1.msra.mxu0 0.0
    %830 = vmatprep.subr.mxu0 0.0
    %831 = vmatpush1.msra.mxu0 0.0
    %832 = vmatprep.subr.mxu0 0.0
    %833 = vmatpush1.msra.mxu0 0.0
    %834 = vmatprep.subr.mxu0 0.0
    %835 = vmatpush1.msra.mxu0 0.0
    %836 = vmatprep.subr.mxu0 0.0
    %837 = vmatpush1.msra.mxu0 0.0
    %838 = vmatprep.subr.mxu0 0.0
    %839 = vmatpush1.msra.mxu0 0.0
    %840 = vmatprep.subr.mxu0 0.0
    %841 = vmatpush1.msra.mxu0 0.0
    %842 = vmatprep.subr.mxu0 0.0
    %843 = vmatpush1.msra.mxu0 0.0
    %844 = vmatprep.subr.mxu0 0.0
    %845 = vmatpush1.msra.mxu0 0.0
    %846 = vmatprep.subr.mxu0 0.0
    %847 = vmatpush1.msra.mxu0 0.0
    %848 = vmatprep.subr.mxu0 0.0
    %849 = vmatpush1.msra.mxu0 0.0
    %850 = vmatprep.subr.mxu0 0.0
    %851 = vmatpush1.msra.mxu0 0.0
    %852 = vmatprep.subr.mxu0 0.0
    %853 = vmatpush1.msra.mxu0 0.0
    %854 = vmatprep.subr.mxu0 0.0
    %855 = vmatpush1.msra.mxu0 0.0
    %856 = vmatprep.subr.mxu0 0.0
    %857 = vmatpush1.msra.mxu0 0.0
    %858 = vmatprep.subr.mxu0 0.0
    %859 = vmatpush1.msra.mxu0 0.0
    %860 = vmatprep.subr.mxu0 0.0
    %861 = vmatpush1.msra.mxu0 0.0
    %862 = vmatprep.subr.mxu0 0.0
    %863 = vmatpush1.msra.mxu0 0.0
    %864 = vmatprep.subr.mxu0 0.0
    %865 = vmatpush1.msra.mxu0 0.0
    %866 = vmatprep.subr.mxu0 0.0
    %867 = vmatpush1.msra.mxu0 0.0
    %868 = vmatprep.subr.mxu0 0.0
    %869 = vmatpush1.msra.mxu0 0.0
    %870 = vmatprep.subr.mxu0 0.0
    %871 = vmatpush1.msra.mxu0 0.0
    %872 = vmatprep.subr.mxu0 0.0
    %873 = vmatpush1.msra.mxu0 0.0
    %874 = vmatprep.subr.mxu0 0.0
    %875 = vmatpush1.msra.mxu0 0.0
    %876 = vmatprep.subr.mxu0 0.0
    %877 = vmatpush1.msra.mxu0 0.0
    %878 = vmatprep.subr.mxu0 0.0
    %879 = vmatpush1.msra.mxu0 0.0
    %880 = vmatprep.subr.mxu0 0.0
    %881 = vmatpush1.msra.mxu0 0.0
    %882 = vmatprep.subr.mxu0 0.0
    %883 = vmatpush1.msra.mxu0 0.0
    %884 = vmatprep.subr.mxu0 0.0
    %885 = vmatpush1.msra.mxu0 0.0
    %886 = vmatprep.subr.mxu0 0.0
    %887 = vmatpush1.msra.mxu0 0.0
    %888 = vmatprep.subr.mxu0 0.0
    %889 = vmatpush1.msra.mxu0 0.0
    %890 = vmatprep.mubr.f32.mxu0 0.0
    %891 = vmatmul.mubr.f32.gmra.mrb[0].mxu0 %v824
    %v892 = vpop.f32.mrb[0].mxu0
    %v893 = vadd.f32 0.0, %v892
    %v894 = vpop.f32.mrb[0].mxu0
    %895 = vdwg.mxu0
    %v897 = vsel %vm624, %v676, 0
    %899 = vmatprep.subr.mxu0 0.0
    %900 = vmatpush1.msra.mxu0 %v75
    %901 = vmatprep.subr.mxu0 0.0
    %902 = vmatpush1.msra.mxu0 0.0
    %903 = vmatprep.subr.mxu0 0.0
    %904 = vmatpush1.msra.mxu0 0.0
    %905 = vmatprep.subr.mxu0 0.0
    %906 = vmatpush1.msra.mxu0 0.0
    %907 = vmatprep.subr.mxu0 0.0
    %908 = vmatpush1.msra.mxu0 0.0
    %909 = vmatprep.subr.mxu0 0.0
    %910 = vmatpush1.msra.mxu0 0.0
    %911 = vmatprep.subr.mxu0 0.0
    %912 = vmatpush1.msra.mxu0 0.0
    %913 = vmatprep.subr.mxu0 0.0
    %914 = vmatpush1.msra.mxu0 0.0
    %915 = vmatprep.subr.mxu0 0.0
    %916 = vmatpush1.msra.mxu0 0.0
    %917 = vmatprep.subr.mxu0 0.0
    %918 = vmatpush1.msra.mxu0 0.0
    %919 = vmatprep.subr.mxu0 0.0
    %920 = vmatpush1.msra.mxu0 0.0
    %921 = vmatprep.subr.mxu0 0.0
    %922 = vmatpush1.msra.mxu0 0.0
    %923 = vmatprep.subr.mxu0 0.0
    %924 = vmatpush1.msra.mxu0 0.0
    %925 = vmatprep.subr.mxu0 0.0
    %926 = vmatpush1.msra.mxu0 0.0
    %927 = vmatprep.subr.mxu0 0.0
    %928 = vmatpush1.msra.mxu0 0.0
    %929 = vmatprep.subr.mxu0 0.0
    %930 = vmatpush1.msra.mxu0 0.0
    %931 = vmatprep.subr.mxu0 0.0
    %932 = vmatpush1.msra.mxu0 0.0
    %933 = vmatprep.subr.mxu0 0.0
    %934 = vmatpush1.msra.mxu0 0.0
    %935 = vmatprep.subr.mxu0 0.0
    %936 = vmatpush1.msra.mxu0 0.0
    %937 = vmatprep.subr.mxu0 0.0
    %938 = vmatpush1.msra.mxu0 0.0
    %939 = vmatprep.subr.mxu0 0.0
    %940 = vmatpush1.msra.mxu0 0.0
    %941 = vmatprep.subr.mxu0 0.0
    %942 = vmatpush1.msra.mxu0 0.0
    %943 = vmatprep.subr.mxu0 0.0
    %944 = vmatpush1.msra.mxu0 0.0
    %945 = vmatprep.subr.mxu0 0.0
    %946 = vmatpush1.msra.mxu0 0.0
    %947 = vmatprep.subr.mxu0 0.0
    %948 = vmatpush1.msra.mxu0 0.0
    %949 = vmatprep.subr.mxu0 0.0
    %950 = vmatpush1.msra.mxu0 0.0
    %951 = vmatprep.subr.mxu0 0.0
    %952 = vmatpush1.msra.mxu0 0.0
    %953 = vmatprep.subr.mxu0 0.0
    %954 = vmatpush1.msra.mxu0 0.0
    %955 = vmatprep.subr.mxu0 0.0
    %956 = vmatpush1.msra.mxu0 0.0
    %957 = vmatprep.subr.mxu0 0.0
    %958 = vmatpush1.msra.mxu0 0.0
    %959 = vmatprep.subr.mxu0 0.0
    %960 = vmatpush1.msra.mxu0 0.0
    %961 = vmatprep.subr.mxu0 0.0
    %962 = vmatpush1.msra.mxu0 0.0
    %963 = vmatprep.mubr.f32.mxu0 0.0
    %964 = vmatmul.mubr.f32.gmra.mrb[0].mxu0 %v897
    %v965 = vpop.f32.mrb[0].mxu0
    %v966 = vadd.f32 0.0, %v965
    %v967 = vpop.f32.mrb[0].mxu0
    %968 = vdwg.mxu0
    %v969 = vld [vmem:[#allocation5] sm:$0xff]
    %v970 = vld [vmem:[#allocation5 + $0x8] sm:$0xff]
    %v971 = vld [vmem:[#allocation5 + $0x10] sm:$0xff]
    %v972 = vld [vmem:[#allocation5 + $0x18] sm:$0xff]
    %v973 = vld [vmem:[#allocation5 + $0x20] sm:$0xff]
    %v974 = vld [vmem:[#allocation5 + $0x28] sm:$0xff]
    %v975 = vld [vmem:[#allocation5 + $0x30] sm:$0xff]
    %v976 = vld [vmem:[#allocation5 + $0x38] sm:$0xff]
    %977 = vmatprep.subr.mxu0 0.0
    %978 = vmatpush1.msra.mxu0 %v973
    %979 = vmatprep.subr.mxu0 0.0
    %980 = vmatpush1.msra.mxu0 %v974
    %981 = vmatprep.subr.mxu0 0.0
    %982 = vmatpush1.msra.mxu0 %v975
    %983 = vmatprep.subr.mxu0 0.0
    %984 = vmatpush1.msra.mxu0 %v976
    %985 = vmatprep.subr.mxu0 0.0
    %986 = vmatpush1.msra.mxu0 0.0
    %987 = vmatprep.subr.mxu0 0.0
    %988 = vmatpush1.msra.mxu0 0.0
    %989 = vmatprep.subr.mxu0 0.0
    %990 = vmatpush1.msra.mxu0 0.0
    %991 = vmatprep.subr.mxu0 0.0
    %992 = vmatpush1.msra.mxu0 0.0
    %993 = vmatprep.subr.mxu0 0.0
    %994 = vmatpush1.msra.mxu0 0.0
    %995 = vmatprep.subr.mxu0 0.0
    %996 = vmatpush1.msra.mxu0 0.0
    %997 = vmatprep.subr.mxu0 0.0
    %998 = vmatpush1.msra.mxu0 0.0
    %999 = vmatprep.subr.mxu0 0.0
    %1000 = vmatpush1.msra.mxu0 0.0
    %1001 = vmatprep.subr.mxu0 0.0
    %1002 = vmatpush1.msra.mxu0 0.0
    %1003 = vmatprep.subr.mxu0 0.0
    %1004 = vmatpush1.msra.mxu0 0.0
    %1005 = vmatprep.subr.mxu0 0.0
    %1006 = vmatpush1.msra.mxu0 0.0
    %1007 = vmatprep.subr.mxu0 0.0
    %1008 = vmatpush1.msra.mxu0 0.0
    %1009 = vmatprep.subr.mxu0 0.0
    %1010 = vmatpush1.msra.mxu0 0.0
    %1011 = vmatprep.subr.mxu0 0.0
    %1012 = vmatpush1.msra.mxu0 0.0
    %1013 = vmatprep.subr.mxu0 0.0
    %1014 = vmatpush1.msra.mxu0 0.0
    %1015 = vmatprep.subr.mxu0 0.0
    %1016 = vmatpush1.msra.mxu0 0.0
    %1017 = vmatprep.subr.mxu0 0.0
    %1018 = vmatpush1.msra.mxu0 0.0
    %1019 = vmatprep.subr.mxu0 0.0
    %1020 = vmatpush1.msra.mxu0 0.0
    %1021 = vmatprep.subr.mxu0 0.0
    %1022 = vmatpush1.msra.mxu0 0.0
    %1023 = vmatprep.subr.mxu0 0.0
    %1024 = vmatpush1.msra.mxu0 0.0
    %1025 = vmatprep.subr.mxu0 0.0
    %1026 = vmatpush1.msra.mxu0 0.0
    %1027 = vmatprep.subr.mxu0 0.0
    %1028 = vmatpush1.msra.mxu0 0.0
    %1029 = vmatprep.subr.mxu0 0.0
    %1030 = vmatpush1.msra.mxu0 0.0
    %1031 = vmatprep.subr.mxu0 0.0
    %1032 = vmatpush1.msra.mxu0 0.0
    %1033 = vmatprep.subr.mxu0 0.0
    %1034 = vmatpush1.msra.mxu0 0.0
    %1035 = vmatprep.subr.mxu0 0.0
    %1036 = vmatpush1.msra.mxu0 0.0
    %1037 = vmatprep.subr.mxu0 0.0
    %1038 = vmatpush1.msra.mxu0 0.0
    %1039 = vmatprep.subr.mxu0 0.0
    %1040 = vmatpush1.msra.mxu0 0.0
    %1041 = vmatprep.mubr.f32.mxu0 0.0
    %1042 = vmatmul.mubr.f32.gmra.mrb[0].mxu0 %v86
    %v1043 = vpop.f32.mrb[0].mxu0
    %v1044 = vadd.f32 0.0, %v1043
    %v1045 = vpop.f32.mrb[0].mxu0
    %1046 = vmatprep.mubr.f32.mxu0 0.0
    %1047 = vmatmul.mubr.f32.gmra.mrb[0].mxu0 %v89
    %v1048 = vpop.f32.mrb[0].mxu0
    %v1049 = vadd.f32 0.0, %v1048
    %v1050 = vpop.f32.mrb[0].mxu0
    %1051 = vmatprep.mubr.f32.mxu0 0.0
    %1052 = vmatmul.mubr.f32.gmra.mrb[0].mxu0 %v92
    %v1053 = vpop.f32.mrb[0].mxu0
    %v1054 = vadd.f32 0.0, %v1053
    %v1055 = vpop.f32.mrb[0].mxu0
    %1056 = vmatprep.mubr.f32.mxu0 0.0
    %1057 = vmatmul.mubr.f32.gmra.mrb[0].mxu0 %v95
    %v1058 = vpop.f32.mrb[0].mxu0
    %v1059 = vadd.f32 0.0, %v1058
    %v1060 = vpop.f32.mrb[0].mxu0
    %1061 = vdwg.mxu0
    %v1063 = vsel %vm84, %v747, 0
    %v1066 = vsel %vm84, %v820, 0
    %v1069 = vsel %vm84, %v893, 0
    %v1072 = vsel %vm84, %v966, 0
    %1074 = vmatprep.subr.mxu0 0.0
    %1075 = vmatpush1.msra.mxu0 %v969
    %1076 = vmatprep.subr.mxu0 0.0
    %1077 = vmatpush1.msra.mxu0 %v970
    %1078 = vmatprep.subr.mxu0 0.0
    %1079 = vmatpush1.msra.mxu0 %v971
    %1080 = vmatprep.subr.mxu0 0.0
    %1081 = vmatpush1.msra.mxu0 %v972
    %1082 = vmatprep.subr.mxu0 0.0
    %1083 = vmatpush1.msra.mxu0 0.0
    %1084 = vmatprep.subr.mxu0 0.0
    %1085 = vmatpush1.msra.mxu0 0.0
    %1086 = vmatprep.subr.mxu0 0.0
    %1087 = vmatpush1.msra.mxu0 0.0
    %1088 = vmatprep.subr.mxu0 0.0
    %1089 = vmatpush1.msra.mxu0 0.0
    %1090 = vmatprep.subr.mxu0 0.0
    %1091 = vmatpush1.msra.mxu0 0.0
    %1092 = vmatprep.subr.mxu0 0.0
    %1093 = vmatpush1.msra.mxu0 0.0
    %1094 = vmatprep.subr.mxu0 0.0
    %1095 = vmatpush1.msra.mxu0 0.0
    %1096 = vmatprep.subr.mxu0 0.0
    %1097 = vmatpush1.msra.mxu0 0.0
    %1098 = vmatprep.subr.mxu0 0.0
    %1099 = vmatpush1.msra.mxu0 0.0
    %1100 = vmatprep.subr.mxu0 0.0
    %1101 = vmatpush1.msra.mxu0 0.0
    %1102 = vmatprep.subr.mxu0 0.0
    %1103 = vmatpush1.msra.mxu0 0.0
    %1104 = vmatprep.subr.mxu0 0.0
    %1105 = vmatpush1.msra.mxu0 0.0
    %1106 = vmatprep.subr.mxu0 0.0
    %1107 = vmatpush1.msra.mxu0 0.0
    %1108 = vmatprep.subr.mxu0 0.0
    %1109 = vmatpush1.msra.mxu0 0.0
    %1110 = vmatprep.subr.mxu0 0.0
    %1111 = vmatpush1.msra.mxu0 0.0
    %1112 = vmatprep.subr.mxu0 0.0
    %1113 = vmatpush1.msra.mxu0 0.0
    %1114 = vmatprep.subr.mxu0 0.0
    %1115 = vmatpush1.msra.mxu0 0.0
    %1116 = vmatprep.subr.mxu0 0.0
    %1117 = vmatpush1.msra.mxu0 0.0
    %1118 = vmatprep.subr.mxu0 0.0
    %1119 = vmatpush1.msra.mxu0 0.0
    %1120 = vmatprep.subr.mxu0 0.0
    %1121 = vmatpush1.msra.mxu0 0.0
    %1122 = vmatprep.subr.mxu0 0.0
    %1123 = vmatpush1.msra.mxu0 0.0
    %1124 = vmatprep.subr.mxu0 0.0
    %1125 = vmatpush1.msra.mxu0 0.0
    %1126 = vmatprep.subr.mxu0 0.0
    %1127 = vmatpush1.msra.mxu0 0.0
    %1128 = vmatprep.subr.mxu0 0.0
    %1129 = vmatpush1.msra.mxu0 0.0
    %1130 = vmatprep.subr.mxu0 0.0
    %1131 = vmatpush1.msra.mxu0 0.0
    %1132 = vmatprep.subr.mxu0 0.0
    %1133 = vmatpush1.msra.mxu0 0.0
    %1134 = vmatprep.subr.mxu0 0.0
    %1135 = vmatpush1.msra.mxu0 0.0
    %1136 = vmatprep.subr.mxu0 0.0
    %1137 = vmatpush1.msra.mxu0 0.0
    %1138 = vmatprep.mubr.f32.mxu0 0.0
    %1139 = vmatmul.mubr.f32.gmra.mrb[0].mxu0 %v1063
    %v1140 = vpop.f32.mrb[0].mxu0
    %v1141 = vadd.f32 %v1044, %v1140
    %v1142 = vpop.f32.mrb[0].mxu0
    %1143 = vmatprep.mubr.f32.mxu0 0.0
    %1144 = vmatmul.mubr.f32.gmra.mrb[0].mxu0 %v1066
    %v1145 = vpop.f32.mrb[0].mxu0
    %v1146 = vadd.f32 %v1049, %v1145
    %v1147 = vpop.f32.mrb[0].mxu0
    %1148 = vmatprep.mubr.f32.mxu0 0.0
    %1149 = vmatmul.mubr.f32.gmra.mrb[0].mxu0 %v1069
    %v1150 = vpop.f32.mrb[0].mxu0
    %v1151 = vadd.f32 %v1054, %v1150
    %v1152 = vpop.f32.mrb[0].mxu0
    %1153 = vmatprep.mubr.f32.mxu0 0.0
    %1154 = vmatmul.mubr.f32.gmra.mrb[0].mxu0 %v1072
    %v1155 = vpop.f32.mrb[0].mxu0
    %v1156 = vadd.f32 %v1059, %v1155
    %v1157 = vpop.f32.mrb[0].mxu0
    %1158 = vdwg.mxu0
    %v1159 = vxor.u32 %v1141, 2147483648
    %v1160 = vxor.u32 %v1146, 2147483648
    %v1161 = vxor.u32 %v1151, 2147483648
    %v1162 = vxor.u32 %v1156, 2147483648
    %v1163 = vmul.f32 %v1159, 1.442695
    %v1164 = vpow.pop %v1163
    %v1165 = vmul.f32 %v1160, 1.442695
    %v1166 = vpow.pop %v1165
    %v1167 = vmul.f32 %v1161, 1.442695
    %v1168 = vpow.pop %v1167
    %v1169 = vmul.f32 %v1162, 1.442695
    %v1170 = vpow.pop %v1169
    %v1171 = vadd.f32 %v1164, 1.0
    %v1172 = vadd.f32 %v1166, 1.0
    %v1173 = vadd.f32 %v1168, 1.0
    %v1174 = vadd.f32 %v1170, 1.0
    %v1175 = vrcp.pop %v1171
    %v1176 = vmul.f32 1.0, %v1175
    %v1177 = vrcp.pop %v1172
    %v1178 = vmul.f32 1.0, %v1177
    %v1179 = vrcp.pop %v1173
    %v1180 = vmul.f32 1.0, %v1179
    %v1181 = vrcp.pop %v1174
    %v1182 = vmul.f32 1.0, %v1181
    %v1183 = vmul.f32 %v747, %v1176
    %v1184 = vmul.f32 %v820, %v1178
    %v1185 = vmul.f32 %v893, %v1180
    %v1186 = vmul.f32 %v966, %v1182
    %1191 = vrot.lane.b32.xlu0 %v1176, 96
    %v1192 = vpop.permute.xlu0 %1191
    %1193 = vrot.lane.b32.xlu0 %v1178, 96
    %v1194 = vpop.permute.xlu0 %1193
    %1195 = vrot.lane.b32.xlu0 %v1180, 96
    %v1196 = vpop.permute.xlu0 %1195
    %1197 = vrot.lane.b32.xlu0 %v1182, 96
    %v1198 = vpop.permute.xlu0 %1197
    %v1203 = vmul.f32 %v68, %v1192
    %v1204 = vmul.f32 %v69, %v1194
    %v1205 = vmul.f32 %v70, %v1196
    %v1206 = vmul.f32 %v71, %v1198
    %v1207 = vld [vmem:[#allocation7] sm:$0xff]
    %v1208 = vld [vmem:[#allocation7 + $0x8] sm:$0xff]
    %v1209 = vld [vmem:[#allocation7 + $0x10] sm:$0xff]
    %v1210 = vld [vmem:[#allocation7 + $0x18] sm:$0xff]
    %v1211 = vld [vmem:[#allocation7 + $0x20] sm:$0xff]
    %v1212 = vld [vmem:[#allocation7 + $0x28] sm:$0xff]
    %v1213 = vld [vmem:[#allocation7 + $0x30] sm:$0xff]
    %v1214 = vld [vmem:[#allocation7 + $0x38] sm:$0xff]
    %v1215 = vld [vmem:[%s6] sm:$0x1]
    %v1217 = vsel %vm84, %v1203, 0
    %v1220 = vsel %vm84, %v1204, 0
    %v1223 = vsel %vm84, %v1205, 0
    %v1226 = vsel %vm84, %v1206, 0
    %1228 = vmatprep.subr.mxu0 0.0
    %1229 = vmatpush1.msra.mxu0 %v1211
    %1230 = vmatprep.subr.mxu0 0.0
    %1231 = vmatpush1.msra.mxu0 %v1212
    %1232 = vmatprep.subr.mxu0 0.0
    %1233 = vmatpush1.msra.mxu0 %v1213
    %1234 = vmatprep.subr.mxu0 0.0
    %1235 = vmatpush1.msra.mxu0 %v1214
    %1236 = vmatprep.subr.mxu0 0.0
    %1237 = vmatpush1.msra.mxu0 0.0
    %1238 = vmatprep.subr.mxu0 0.0
    %1239 = vmatpush1.msra.mxu0 0.0
    %1240 = vmatprep.subr.mxu0 0.0
    %1241 = vmatpush1.msra.mxu0 0.0
    %1242 = vmatprep.subr.mxu0 0.0
    %1243 = vmatpush1.msra.mxu0 0.0
    %1244 = vmatprep.subr.mxu0 0.0
    %1245 = vmatpush1.msra.mxu0 0.0
    %1246 = vmatprep.subr.mxu0 0.0
    %1247 = vmatpush1.msra.mxu0 0.0
    %1248 = vmatprep.subr.mxu0 0.0
    %1249 = vmatpush1.msra.mxu0 0.0
    %1250 = vmatprep.subr.mxu0 0.0
    %1251 = vmatpush1.msra.mxu0 0.0
    %1252 = vmatprep.subr.mxu0 0.0
    %1253 = vmatpush1.msra.mxu0 0.0
    %1254 = vmatprep.subr.mxu0 0.0
    %1255 = vmatpush1.msra.mxu0 0.0
    %1256 = vmatprep.subr.mxu0 0.0
    %1257 = vmatpush1.msra.mxu0 0.0
    %1258 = vmatprep.subr.mxu0 0.0
    %1259 = vmatpush1.msra.mxu0 0.0
    %1260 = vmatprep.subr.mxu0 0.0
    %1261 = vmatpush1.msra.mxu0 0.0
    %1262 = vmatprep.subr.mxu0 0.0
    %1263 = vmatpush1.msra.mxu0 0.0
    %1264 = vmatprep.subr.mxu0 0.0
    %1265 = vmatpush1.msra.mxu0 0.0
    %1266 = vmatprep.subr.mxu0 0.0
    %1267 = vmatpush1.msra.mxu0 0.0
    %1268 = vmatprep.subr.mxu0 0.0
    %1269 = vmatpush1.msra.mxu0 0.0
    %1270 = vmatprep.subr.mxu0 0.0
    %1271 = vmatpush1.msra.mxu0 0.0
    %1272 = vmatprep.subr.mxu0 0.0
    %1273 = vmatpush1.msra.mxu0 0.0
    %1274 = vmatprep.subr.mxu0 0.0
    %1275 = vmatpush1.msra.mxu0 0.0
    %1276 = vmatprep.subr.mxu0 0.0
    %1277 = vmatpush1.msra.mxu0 0.0
    %1278 = vmatprep.subr.mxu0 0.0
    %1279 = vmatpush1.msra.mxu0 0.0
    %1280 = vmatprep.subr.mxu0 0.0
    %1281 = vmatpush1.msra.mxu0 0.0
    %1282 = vmatprep.subr.mxu0 0.0
    %1283 = vmatpush1.msra.mxu0 0.0
    %1284 = vmatprep.subr.mxu0 0.0
    %1285 = vmatpush1.msra.mxu0 0.0
    %1286 = vmatprep.subr.mxu0 0.0
    %1287 = vmatpush1.msra.mxu0 0.0
    %1288 = vmatprep.subr.mxu0 0.0
    %1289 = vmatpush1.msra.mxu0 0.0
    %1290 = vmatprep.subr.mxu0 0.0
    %1291 = vmatpush1.msra.mxu0 0.0
    %1292 = vmatprep.mubr.f32.mxu0 0.0
    %1293 = vmatmul.mubr.f32.gmra.mrb[0].mxu0 %v1217
    %v1294 = vpop.f32.mrb[0].mxu0
    %v1295 = vadd.f32 0.0, %v1294
    %v1296 = vpop.f32.mrb[0].mxu0
    %1297 = vmatprep.mubr.f32.mxu0 0.0
    %1298 = vmatmul.mubr.f32.gmra.mrb[0].mxu0 %v1220
    %v1299 = vpop.f32.mrb[0].mxu0
    %v1300 = vadd.f32 0.0, %v1299
    %v1301 = vpop.f32.mrb[0].mxu0
    %1302 = vmatprep.mubr.f32.mxu0 0.0
    %1303 = vmatmul.mubr.f32.gmra.mrb[0].mxu0 %v1223
    %v1304 = vpop.f32.mrb[0].mxu0
    %v1305 = vadd.f32 0.0, %v1304
    %v1306 = vpop.f32.mrb[0].mxu0
    %1307 = vmatprep.mubr.f32.mxu0 0.0
    %1308 = vmatmul.mubr.f32.gmra.mrb[0].mxu0 %v1226
    %v1309 = vpop.f32.mrb[0].mxu0
    %v1310 = vadd.f32 0.0, %v1309
    %v1311 = vpop.f32.mrb[0].mxu0
    %1312 = vdwg.mxu0
    %v1314 = vsel %vm84, %v1183, 0
    %v1317 = vsel %vm84, %v1184, 0
    %v1320 = vsel %vm84, %v1185, 0
    %v1323 = vsel %vm84, %v1186, 0
    %1325 = vmatprep.subr.mxu0 0.0
    %1326 = vmatpush1.msra.mxu0 %v1207
    %1327 = vmatprep.subr.mxu0 0.0
    %1328 = vmatpush1.msra.mxu0 %v1208
    %1329 = vmatprep.subr.mxu0 0.0
    %1330 = vmatpush1.msra.mxu0 %v1209
    %1331 = vmatprep.subr.mxu0 0.0
    %1332 = vmatpush1.msra.mxu0 %v1210
    %1333 = vmatprep.subr.mxu0 0.0
    %1334 = vmatpush1.msra.mxu0 0.0
    %1335 = vmatprep.subr.mxu0 0.0
    %1336 = vmatpush1.msra.mxu0 0.0
    %1337 = vmatprep.subr.mxu0 0.0
    %1338 = vmatpush1.msra.mxu0 0.0
    %1339 = vmatprep.subr.mxu0 0.0
    %1340 = vmatpush1.msra.mxu0 0.0
    %1341 = vmatprep.subr.mxu0 0.0
    %1342 = vmatpush1.msra.mxu0 0.0
    %1343 = vmatprep.subr.mxu0 0.0
    %1344 = vmatpush1.msra.mxu0 0.0
    %1345 = vmatprep.subr.mxu0 0.0
    %1346 = vmatpush1.msra.mxu0 0.0
    %1347 = vmatprep.subr.mxu0 0.0
    %1348 = vmatpush1.msra.mxu0 0.0
    %1349 = vmatprep.subr.mxu0 0.0
    %1350 = vmatpush1.msra.mxu0 0.0
    %1351 = vmatprep.subr.mxu0 0.0
    %1352 = vmatpush1.msra.mxu0 0.0
    %1353 = vmatprep.subr.mxu0 0.0
    %1354 = vmatpush1.msra.mxu0 0.0
    %1355 = vmatprep.subr.mxu0 0.0
    %1356 = vmatpush1.msra.mxu0 0.0
    %1357 = vmatprep.subr.mxu0 0.0
    %1358 = vmatpush1.msra.mxu0 0.0
    %1359 = vmatprep.subr.mxu0 0.0
    %1360 = vmatpush1.msra.mxu0 0.0
    %1361 = vmatprep.subr.mxu0 0.0
    %1362 = vmatpush1.msra.mxu0 0.0
    %1363 = vmatprep.subr.mxu0 0.0
    %1364 = vmatpush1.msra.mxu0 0.0
    %1365 = vmatprep.subr.mxu0 0.0
    %1366 = vmatpush1.msra.mxu0 0.0
    %1367 = vmatprep.subr.mxu0 0.0
    %1368 = vmatpush1.msra.mxu0 0.0
    %1369 = vmatprep.subr.mxu0 0.0
    %1370 = vmatpush1.msra.mxu0 0.0
    %1371 = vmatprep.subr.mxu0 0.0
    %1372 = vmatpush1.msra.mxu0 0.0
    %1373 = vmatprep.subr.mxu0 0.0
    %1374 = vmatpush1.msra.mxu0 0.0
    %1375 = vmatprep.subr.mxu0 0.0
    %1376 = vmatpush1.msra.mxu0 0.0
    %1377 = vmatprep.subr.mxu0 0.0
    %1378 = vmatpush1.msra.mxu0 0.0
    %1379 = vmatprep.subr.mxu0 0.0
    %1380 = vmatpush1.msra.mxu0 0.0
    %1381 = vmatprep.subr.mxu0 0.0
    %1382 = vmatpush1.msra.mxu0 0.0
    %1383 = vmatprep.subr.mxu0 0.0
    %1384 = vmatpush1.msra.mxu0 0.0
    %1385 = vmatprep.subr.mxu0 0.0
    %1386 = vmatpush1.msra.mxu0 0.0
    %1387 = vmatprep.subr.mxu0 0.0
    %1388 = vmatpush1.msra.mxu0 0.0
    %1389 = vmatprep.mubr.f32.mxu0 0.0
    %1390 = vmatmul.mubr.f32.gmra.mrb[0].mxu0 %v1314
    %v1391 = vpop.f32.mrb[0].mxu0
    %v1392 = vadd.f32 %v1295, %v1391
    %v1393 = vpop.f32.mrb[0].mxu0
    %1394 = vmatprep.mubr.f32.mxu0 0.0
    %1395 = vmatmul.mubr.f32.gmra.mrb[0].mxu0 %v1317
    %v1396 = vpop.f32.mrb[0].mxu0
    %v1397 = vadd.f32 %v1300, %v1396
    %v1398 = vpop.f32.mrb[0].mxu0
    %1399 = vmatprep.mubr.f32.mxu0 0.0
    %1400 = vmatmul.mubr.f32.gmra.mrb[0].mxu0 %v1320
    %v1401 = vpop.f32.mrb[0].mxu0
    %v1402 = vadd.f32 %v1305, %v1401
    %v1403 = vpop.f32.mrb[0].mxu0
    %1404 = vmatprep.mubr.f32.mxu0 0.0
    %1405 = vmatmul.mubr.f32.gmra.mrb[0].mxu0 %v1323
    %v1406 = vpop.f32.mrb[0].mxu0
    %v1407 = vadd.f32 %v1310, %v1406
    %v1408 = vpop.f32.mrb[0].mxu0
    %1409 = vdwg.mxu0
    %v1411 = vlaneseq
    %v1412 = vshrl.u32 %v1411, 7
    %v1413 = vsub.s32 0, %v1412
    %v1414 = vrot.slane %v1215, %v1413
    %v1416 = vadd.f32 %v1392, %v1414
    %v1417 = vadd.f32 %v1397, %v1414
    %v1418 = vadd.f32 %v1402, %v1414
    %v1419 = vadd.f32 %v1407, %v1414
    %vm1420 = vcmask 785408
    %1421 = vst.msk [vmem:[#allocation8] sm:$0xff] %vm1420, %v1416
    %1422 = vst.msk [vmem:[#allocation8 + $0x8] sm:$0xff] %vm1420, %v1417
    %1423 = vst.msk [vmem:[#allocation8 + $0x10] sm:$0xff] %vm1420, %v1418
    %1424 = vst.msk [vmem:[#allocation8 + $0x18] sm:$0xff] %vm1420, %v1419
    %s1425 = scalar_lea.vmem [#allocation7], 64
    %v1426 = vld [vmem:[%s1425] sm:$0xff]
    %v1427 = vld [vmem:[%s1425 + $0x8] sm:$0xff]
    %v1428 = vld [vmem:[%s1425 + $0x10] sm:$0xff]
    %v1429 = vld [vmem:[%s1425 + $0x18] sm:$0xff]
    %v1430 = vld [vmem:[%s1425 + $0x20] sm:$0xff]
    %v1431 = vld [vmem:[%s1425 + $0x28] sm:$0xff]
    %v1432 = vld [vmem:[%s1425 + $0x30] sm:$0xff]
    %v1433 = vld [vmem:[%s1425 + $0x38] sm:$0xff]
    %s1434 = scalar_lea.vmem %s6, 1
    %v1435 = vld [vmem:[%s1434] sm:$0x1]
    %1436 = vmatprep.subr.mxu0 0.0
    %1437 = vmatpush1.msra.mxu0 %v1430
    %1438 = vmatprep.subr.mxu0 0.0
    %1439 = vmatpush1.msra.mxu0 %v1431
    %1440 = vmatprep.subr.mxu0 0.0
    %1441 = vmatpush1.msra.mxu0 %v1432
    %1442 = vmatprep.subr.mxu0 0.0
    %1443 = vmatpush1.msra.mxu0 %v1433
    %1444 = vmatprep.subr.mxu0 0.0
    %1445 = vmatpush1.msra.mxu0 0.0
    %1446 = vmatprep.subr.mxu0 0.0
    %1447 = vmatpush1.msra.mxu0 0.0
    %1448 = vmatprep.subr.mxu0 0.0
    %1449 = vmatpush1.msra.mxu0 0.0
    %1450 = vmatprep.subr.mxu0 0.0
    %1451 = vmatpush1.msra.mxu0 0.0
    %1452 = vmatprep.subr.mxu0 0.0
    %1453 = vmatpush1.msra.mxu0 0.0
    %1454 = vmatprep.subr.mxu0 0.0
    %1455 = vmatpush1.msra.mxu0 0.0
    %1456 = vmatprep.subr.mxu0 0.0
    %1457 = vmatpush1.msra.mxu0 0.0
    %1458 = vmatprep.subr.mxu0 0.0
    %1459 = vmatpush1.msra.mxu0 0.0
    %1460 = vmatprep.subr.mxu0 0.0
    %1461 = vmatpush1.msra.mxu0 0.0
    %1462 = vmatprep.subr.mxu0 0.0
    %1463 = vmatpush1.msra.mxu0 0.0
    %1464 = vmatprep.subr.mxu0 0.0
    %1465 = vmatpush1.msra.mxu0 0.0
    %1466 = vmatprep.subr.mxu0 0.0
    %1467 = vmatpush1.msra.mxu0 0.0
    %1468 = vmatprep.subr.mxu0 0.0
    %1469 = vmatpush1.msra.mxu0 0.0
    %1470 = vmatprep.subr.mxu0 0.0
    %1471 = vmatpush1.msra.mxu0 0.0
    %1472 = vmatprep.subr.mxu0 0.0
    %1473 = vmatpush1.msra.mxu0 0.0
    %1474 = vmatprep.subr.mxu0 0.0
    %1475 = vmatpush1.msra.mxu0 0.0
    %1476 = vmatprep.subr.mxu0 0.0
    %1477 = vmatpush1.msra.mxu0 0.0
    %1478 = vmatprep.subr.mxu0 0.0
    %1479 = vmatpush1.msra.mxu0 0.0
    %1480 = vmatprep.subr.mxu0 0.0
    %1481 = vmatpush1.msra.mxu0 0.0
    %1482 = vmatprep.subr.mxu0 0.0
    %1483 = vmatpush1.msra.mxu0 0.0
    %1484 = vmatprep.subr.mxu0 0.0
    %1485 = vmatpush1.msra.mxu0 0.0
    %1486 = vmatprep.subr.mxu0 0.0
    %1487 = vmatpush1.msra.mxu0 0.0
    %1488 = vmatprep.subr.mxu0 0.0
    %1489 = vmatpush1.msra.mxu0 0.0
    %1490 = vmatprep.subr.mxu0 0.0
    %1491 = vmatpush1.msra.mxu0 0.0
    %1492 = vmatprep.subr.mxu0 0.0
    %1493 = vmatpush1.msra.mxu0 0.0
    %1494 = vmatprep.subr.mxu0 0.0
    %1495 = vmatpush1.msra.mxu0 0.0
    %1496 = vmatprep.subr.mxu0 0.0
    %1497 = vmatpush1.msra.mxu0 0.0
    %1498 = vmatprep.subr.mxu0 0.0
    %1499 = vmatpush1.msra.mxu0 0.0
    %1500 = vmatprep.mubr.f32.mxu0 0.0
    %1501 = vmatmul.mubr.f32.gmra.mrb[0].mxu0 %v1217
    %v1502 = vpop.f32.mrb[0].mxu0
    %v1503 = vadd.f32 0.0, %v1502
    %v1504 = vpop.f32.mrb[0].mxu0
    %1505 = vmatprep.mubr.f32.mxu0 0.0
    %1506 = vmatmul.mubr.f32.gmra.mrb[0].mxu0 %v1220
    %v1507 = vpop.f32.mrb[0].mxu0
    %v1508 = vadd.f32 0.0, %v1507
    %v1509 = vpop.f32.mrb[0].mxu0
    %1510 = vmatprep.mubr.f32.mxu0 0.0
    %1511 = vmatmul.mubr.f32.gmra.mrb[0].mxu0 %v1223
    %v1512 = vpop.f32.mrb[0].mxu0
    %v1513 = vadd.f32 0.0, %v1512
    %v1514 = vpop.f32.mrb[0].mxu0
    %1515 = vmatprep.mubr.f32.mxu0 0.0
    %1516 = vmatmul.mubr.f32.gmra.mrb[0].mxu0 %v1226
    %v1517 = vpop.f32.mrb[0].mxu0
    %v1518 = vadd.f32 0.0, %v1517
    %v1519 = vpop.f32.mrb[0].mxu0
    %1520 = vdwg.mxu0
    %1521 = vmatprep.subr.mxu0 0.0
    %1522 = vmatpush1.msra.mxu0 %v1426
    %1523 = vmatprep.subr.mxu0 0.0
    %1524 = vmatpush1.msra.mxu0 %v1427
    %1525 = vmatprep.subr.mxu0 0.0
    %1526 = vmatpush1.msra.mxu0 %v1428
    %1527 = vmatprep.subr.mxu0 0.0
    %1528 = vmatpush1.msra.mxu0 %v1429
    %1529 = vmatprep.subr.mxu0 0.0
    %1530 = vmatpush1.msra.mxu0 0.0
    %1531 = vmatprep.subr.mxu0 0.0
    %1532 = vmatpush1.msra.mxu0 0.0
    %1533 = vmatprep.subr.mxu0 0.0
    %1534 = vmatpush1.msra.mxu0 0.0
    %1535 = vmatprep.subr.mxu0 0.0
    %1536 = vmatpush1.msra.mxu0 0.0
    %1537 = vmatprep.subr.mxu0 0.0
    %1538 = vmatpush1.msra.mxu0 0.0
    %1539 = vmatprep.subr.mxu0 0.0
    %1540 = vmatpush1.msra.mxu0 0.0
    %1541 = vmatprep.subr.mxu0 0.0
    %1542 = vmatpush1.msra.mxu0 0.0
    %1543 = vmatprep.subr.mxu0 0.0
    %1544 = vmatpush1.msra.mxu0 0.0
    %1545 = vmatprep.subr.mxu0 0.0
    %1546 = vmatpush1.msra.mxu0 0.0
    %1547 = vmatprep.subr.mxu0 0.0
    %1548 = vmatpush1.msra.mxu0 0.0
    %1549 = vmatprep.subr.mxu0 0.0
    %1550 = vmatpush1.msra.mxu0 0.0
    %1551 = vmatprep.subr.mxu0 0.0
    %1552 = vmatpush1.msra.mxu0 0.0
    %1553 = vmatprep.subr.mxu0 0.0
    %1554 = vmatpush1.msra.mxu0 0.0
    %1555 = vmatprep.subr.mxu0 0.0
    %1556 = vmatpush1.msra.mxu0 0.0
    %1557 = vmatprep.subr.mxu0 0.0
    %1558 = vmatpush1.msra.mxu0 0.0
    %1559 = vmatprep.subr.mxu0 0.0
    %1560 = vmatpush1.msra.mxu0 0.0
    %1561 = vmatprep.subr.mxu0 0.0
    %1562 = vmatpush1.msra.mxu0 0.0
    %1563 = vmatprep.subr.mxu0 0.0
    %1564 = vmatpush1.msra.mxu0 0.0
    %1565 = vmatprep.subr.mxu0 0.0
    %1566 = vmatpush1.msra.mxu0 0.0
    %1567 = vmatprep.subr.mxu0 0.0
    %1568 = vmatpush1.msra.mxu0 0.0
    %1569 = vmatprep.subr.mxu0 0.0
    %1570 = vmatpush1.msra.mxu0 0.0
    %1571 = vmatprep.subr.mxu0 0.0
    %1572 = vmatpush1.msra.mxu0 0.0
    %1573 = vmatprep.subr.mxu0 0.0
    %1574 = vmatpush1.msra.mxu0 0.0
    %1575 = vmatprep.subr.mxu0 0.0
    %1576 = vmatpush1.msra.mxu0 0.0
    %1577 = vmatprep.subr.mxu0 0.0
    %1578 = vmatpush1.msra.mxu0 0.0
    %1579 = vmatprep.subr.mxu0 0.0
    %1580 = vmatpush1.msra.mxu0 0.0
    %1581 = vmatprep.subr.mxu0 0.0
    %1582 = vmatpush1.msra.mxu0 0.0
    %1583 = vmatprep.subr.mxu0 0.0
    %1584 = vmatpush1.msra.mxu0 0.0
    %1585 = vmatprep.mubr.f32.mxu0 0.0
    %1586 = vmatmul.mubr.f32.gmra.mrb[0].mxu0 %v1314
    %v1587 = vpop.f32.mrb[0].mxu0
    %v1588 = vadd.f32 %v1503, %v1587
    %v1589 = vpop.f32.mrb[0].mxu0
    %1590 = vmatprep.mubr.f32.mxu0 0.0
    %1591 = vmatmul.mubr.f32.gmra.mrb[0].mxu0 %v1317
    %v1592 = vpop.f32.mrb[0].mxu0
    %v1593 = vadd.f32 %v1508, %v1592
    %v1594 = vpop.f32.mrb[0].mxu0
    %1595 = vmatprep.mubr.f32.mxu0 0.0
    %1596 = vmatmul.mubr.f32.gmra.mrb[0].mxu0 %v1320
    %v1597 = vpop.f32.mrb[0].mxu0
    %v1598 = vadd.f32 %v1513, %v1597
    %v1599 = vpop.f32.mrb[0].mxu0
    %1600 = vmatprep.mubr.f32.mxu0 0.0
    %1601 = vmatmul.mubr.f32.gmra.mrb[0].mxu0 %v1323
    %v1602 = vpop.f32.mrb[0].mxu0
    %v1603 = vadd.f32 %v1518, %v1602
    %v1604 = vpop.f32.mrb[0].mxu0
    %1605 = vdwg.mxu0
    %v1607 = vlaneseq
    %v1608 = vshrl.u32 %v1607, 7
    %v1609 = vsub.s32 0, %v1608
    %v1610 = vrot.slane %v1435, %v1609
    %v1612 = vadd.f32 %v1588, %v1610
    %v1613 = vadd.f32 %v1593, %v1610
    %v1614 = vadd.f32 %v1598, %v1610
    %v1615 = vadd.f32 %v1603, %v1610
    %s1616 = scalar_lea.vmem [#allocation8], 32
    %1617 = vst.msk [vmem:[%s1616] sm:$0xff] %vm1420, %v1612
    %1618 = vst.msk [vmem:[%s1616 + $0x8] sm:$0xff] %vm1420, %v1613
    %1619 = vst.msk [vmem:[%s1616 + $0x10] sm:$0xff] %vm1420, %v1614
    %1620 = vst.msk [vmem:[%s1616 + $0x18] sm:$0xff] %vm1420, %v1615
    // Predicated region
    $region42: #{tpu_custom_call.1} parent=1 // pred_check
      _
    $region43: #{tpu_custom_call.1} parent=1 // pred_check_branch
      %1622 = sbr.rel (0) target = $region45
    $region44: #{tpu_custom_call.1} parent=1 // pred_region
      %s1624 = ssub.s32 1024, 1024
      %1625 = vsyncadd [#allocation4], %s1624
      %s1626 = sshll.u32 [#allocation8], 4
      %s1627 = int_to_ptr.vmem [resolvable:$true] %s1626
      %1632 = dma.vmem_to_hbm [thread:$0]  %s1627, 1024, %s7, [#allocation4], 128, 128, 8
    $region45: #{tpu_custom_call.1} parent=1 // pred_fallthru
      _
    // Predicated region
    $region46: #{tpu_custom_call.1} parent=1 // pred_check
      _
    $region47: #{tpu_custom_call.1} parent=1 // pred_check_branch
      %1634 = sbr.rel (0) target = $region49
    $region48: #{tpu_custom_call.1} parent=1 // pred_region
      %1635 = dma.done [#allocation4], 1024
    $region49: #{tpu_custom_call.1} parent=1 // pred_fallthru
      _
    %1636 = vsyncpa [#allocation3], 1
    %1637 = vsyncpa [#allocation6], 1
    %1638 = vsyncpa [#allocation4], 1

</llo_original>
